<compile_context>
chip_gen: v7x
topology: tpu7x:2x2x1
jax: 0.10.0
libtpu: 0.0.40
codegen_flags: <defaults>
</compile_context>

<pallas_src>
import jax
import jax.numpy as jnp
from jax import lax
from jax.experimental import pallas as pl
from jax.experimental.pallas import tpu as pltpu


def transformer_model_kernel(
    x0_ref,                 # [S, H] f32 : embedded input (token + positional), from wrapper
    wq_ref, bq_ref,         # [H, K] (f32 or bf16), [1, K] f32
    wk_ref, bk_ref,         # [H, K], [1, K]
    wv_ref, bv_ref,         # [H, K], [1, K]
    wo_ref, bo_ref,         # [K, H], [1, H]
    w1_ref, b1_ref,         # [H, M], [1, M]
    w2_ref, b2_ref,         # [M, H], [1, H]
    out_ref,                # [S, H] f32 : same block every grid step -> VMEM-resident layer carry
):
    l = pl.program_id(0)
    wdt = wq_ref.dtype      # MXU streaming dtype (f32 or bf16); accumulation is always f32

    @pl.when(l == 0)
    def _():
        out_ref[...] = x0_ref[...]

    x = out_ref[...]                          # [S, H] f32, carried across layer iterations
    x_m = x.astype(wdt)

    # ---- AttentionBlock ----
    q = jnp.dot(x_m, wq_ref[...], preferred_element_type=jnp.float32) + bq_ref[...]  # [S, K]
    k = jnp.dot(x_m, wk_ref[...], preferred_element_type=jnp.float32) + bk_ref[...]  # [S, K]
    v = jnp.dot(x_m, wv_ref[...], preferred_element_type=jnp.float32) + bv_ref[...]  # [S, K]

    # einsum('ij,kj->ik', q, k): contract last dims, no materialized transpose.
    scores = lax.dot_general(q.astype(wdt), k.astype(wdt), (((1,), (1,)), ((), ())),
                             preferred_element_type=jnp.float32)                      # [S, S]

    # nn.Softmax(dim=1) on a 2D [S, S] tensor == softmax over the last axis; exact reciprocal.
    m = jnp.max(scores, axis=-1, keepdims=True)
    e = jnp.exp(scores - m)
    attn = e / jnp.sum(e, axis=-1, keepdims=True)

    weighted = jnp.dot(attn.astype(wdt), v.astype(wdt),
                       preferred_element_type=jnp.float32)                             # [S, K]
    attn_out = jnp.dot(weighted.astype(wdt), wo_ref[...],
                       preferred_element_type=jnp.float32) + bo_ref[...]               # [S, H]

    x1 = x + attn_out                          # first residual (f32)

    # ---- MLP ----
    h = jnp.dot(x1.astype(wdt), w1_ref[...], preferred_element_type=jnp.float32) + b1_ref[...]
    h = jnp.maximum(h, 0.0)                    # ReLU (f32)
    mlp_out = jnp.dot(h.astype(wdt), w2_ref[...],
                      preferred_element_type=jnp.float32) + b2_ref[...]

    out_ref[...] = x1 + mlp_out                # second residual -> carry / final output


def transformer_model(ids, params):
    """ids: [S] int32 token ids. params: dict of stacked per-layer weights (see init_params).
    Weight matrices (wq/wk/wv/wo/w1/w2) may be f32 or bf16 (bf16 streaming recommended on
    v6e/v7x); biases and embedding tables are f32."""
    tok = params["token_emb"]                  # [V, H] f32
    pos = params["pos_emb"]                    # [max_seq_len, H] f32
    S = int(ids.shape[0])
    V, H = tok.shape
    L, _, K = params["wq"].shape
    M = params["w1"].shape[-1]

    # Embedding gather in XLA (perf review): no vocab table in VMEM, no one-hot matmul.
    x0 = tok[ids, :] + pos[:S, :]              # [S, H] f32

    def const_spec(shape):
        # Same block every layer iteration -> fetched once, stays VMEM-resident.
        n = len(shape)
        return pl.BlockSpec(shape, lambda l, n=n: (0,) * n)

    def layer_spec(shape):
        # Leading layer dim squeezed out; streamed per grid step (auto double-buffered).
        n = len(shape)
        return pl.BlockSpec((None,) + shape, lambda l, n=n: (l,) + (0,) * n)

    # Explicit scoped-VMEM budget (review: re-derive for v7x's 64 MiB physical VMEM).
    wbytes = jnp.dtype(params["wq"].dtype).itemsize
    per_layer_w = (3 * H * K + K * H + H * M + M * H) * wbytes           # streamed weights
    per_layer_b = (3 * K + H + M + H) * 4                                # f32 biases
    resident = 2 * S * H * 4                                             # x0 + out/carry
    interm = S * (3 * K + S + K + 2 * H + M) * 4                         # qkv/scores/attn/mlp temps
    needed = resident + 2 * (per_layer_w + per_layer_b) + interm         # 2x: double-buffering
    vmem_limit = int(min(max(4 * needed, 32 * 2 ** 20), 64 * 2 ** 20))   # safe on v5e/v6e/v7x

    return pl.pallas_call(
        transformer_model_kernel,
        out_shape=jax.ShapeDtypeStruct((S, H), jnp.float32),
        grid=(L,),
        in_specs=[
            const_spec((S, H)),        # x0 (embedded input), VMEM-resident across all layers
            layer_spec((H, K)),        # wq
            layer_spec((1, K)),        # bq
            layer_spec((H, K)),        # wk
            layer_spec((1, K)),        # bk
            layer_spec((H, K)),        # wv
            layer_spec((1, K)),        # bv
            layer_spec((K, H)),        # wo
            layer_spec((1, H)),        # bo
            layer_spec((H, M)),        # w1
            layer_spec((1, M)),        # b1
            layer_spec((M, H)),        # w2
            layer_spec((1, H)),        # b2
        ],
        # Same (0,0) block every step -> VMEM-resident output; doubles as the layer carry.
        out_specs=pl.BlockSpec((S, H), lambda l: (0, 0)),
        compiler_params=pltpu.CompilerParams(
            dimension_semantics=("arbitrary",),   # layer axis is inherently serial (carry)
            vmem_limit_bytes=vmem_limit,
        ),
    )(x0, params["wq"], params["bq"], params["wk"], params["bk"],
      params["wv"], params["bv"], params["wo"], params["bo"],
      params["w1"], params["b1"], params["w2"], params["b2"])


def init_params(key, *, vocab_size, max_seq_len, hidden_size, key_size,
                mlp_hidden_size, num_layers):
    """Deterministic f32 init. PyTorch Linear weights are [out, in]; stored pre-transposed as
    [in, out] so the kernel computes y = x @ W + b directly on the MXU.
    NOTE: when key_size % 128 == 0, fuse wq|wk|wv here (once, at init — not per forward call)
    into a single [H, 3K] weight for one MXU push; at key_size < 128 separate projections avoid
    intra-vreg lane-offset slices (perf review)."""
    keys = jax.random.split(key, 2 + 12 * num_layers)
    token_emb = jax.random.normal(keys[0], (vocab_size, hidden_size), jnp.float32)
    pos_emb = jax.random.normal(keys[1], (max_seq_len, hidden_size), jnp.float32)

    def lin(kw, kb, fan_in, fan_out):
        bound = 1.0 / (fan_in ** 0.5)
        w = jax.random.uniform(kw, (fan_in, fan_out), jnp.float32, -bound, bound)
        b = jax.random.uniform(kb, (1, fan_out), jnp.float32, -bound, bound)
        return w, b

    lists = {n: [] for n in ("wq", "bq", "wk", "bk", "wv", "bv",
                             "wo", "bo", "w1", "b1", "w2", "b2")}
    idx = 2
    for _ in range(num_layers):
        kk = keys[idx:idx + 12]
        idx += 12
        for name_w, name_b, fi, fo, kw, kb in (
            ("wk", "bk", hidden_size, key_size, kk[0], kk[1]),
            ("wq", "bq", hidden_size, key_size, kk[2], kk[3]),
            ("wv", "bv", hidden_size, key_size, kk[4], kk[5]),
            ("wo", "bo", key_size, hidden_size, kk[6], kk[7]),
            ("w1", "b1", hidden_size, mlp_hidden_size, kk[8], kk[9]),
            ("w2", "b2", mlp_hidden_size, hidden_size, kk[10], kk[11]),
        ):
            w, b = lin(kw, kb, fi, fo)
            lists[name_w].append(w)
            lists[name_b].append(b)

    params = {n: jnp.stack(v, axis=0) for n, v in lists.items()}
    params["token_emb"] = token_emb
    params["pos_emb"] = pos_emb
    return params


_STREAMED_WEIGHTS = ("wq", "wk", "wv", "wo", "w1", "w2")


def with_weight_dtype(params, dtype):
    """Cast the streamed weight matrices to `dtype` (e.g. bf16 for v6e/v7x weight streaming).
    Biases and embedding tables stay f32 (elementwise work stays f32 on all generations)."""
    out = dict(params)
    for name in _STREAMED_WEIGHTS:
        out[name] = params[name].astype(dtype)
    return out


def reference(ids, params, matmul_dtype=None):
    """Pure-JAX mirror of the PyTorch TransformerModel.forward.
    If matmul_dtype is given, both operands of every matmul are cast to it (f32 accumulation),
    mirroring the kernel's mixed-precision weight-streaming mode exactly."""
    def mm(a, b):
        if matmul_dtype is not None:
            a, b = a.astype(matmul_dtype), b.astype(matmul_dtype)
        return jnp.dot(a, b, preferred_element_type=jnp.float32)

    x = params["token_emb"][ids, :] + params["pos_emb"][:ids.shape[0], :]
    for l in range(params["wq"].shape[0]):
        q = mm(x, params["wq"][l]) + params["bq"][l]
        k = mm(x, params["wk"][l]) + params["bk"][l]
        v = mm(x, params["wv"][l]) + params["bv"][l]
        attn = jax.nn.softmax(mm(q, k.T), axis=1)
        weighted = mm(attn, v)
        x = x + mm(weighted, params["wo"][l]) + params["bo"][l]
        h = jax.nn.relu(mm(x, params["w1"][l]) + params["b1"][l])
        x = x + mm(h, params["w2"][l]) + params["b2"][l]
    return x


if __name__ == "__main__":
    SEQ, HIDDEN, KEY_SIZE, MLP_HIDDEN = 8, 32, 16, 64
    VOCAB, MAX_SEQ, LAYERS = 64, 16, 3

    root = jax.random.PRNGKey(0)
    k_ids, k_params = jax.random.split(root)
    ids = jax.random.randint(k_ids, (SEQ,), 0, VOCAB, dtype=jnp.int32)
    params = init_params(k_params, vocab_size=VOCAB, max_seq_len=MAX_SEQ,
                         hidden_size=HIDDEN, key_size=KEY_SIZE,
                         mlp_hidden_size=MLP_HIDDEN, num_layers=LAYERS)

    # --- f32 weight streaming: semantic check against the PyTorch-equivalent reference.
    #     No approximate transcendentals are used; the tolerance only covers possible reduced
    #     internal MXU precision for f32 operands (generation / default-precision dependent).
    out_f32 = jax.block_until_ready(transformer_model(ids, params))
    ref_f32 = reference(ids, params)
    assert out_f32.shape == (SEQ, HIDDEN)
    err_f32 = float(jnp.max(jnp.abs(out_f32 - ref_f32)))
    assert jnp.allclose(out_f32, ref_f32, atol=2e-2, rtol=2e-2), \
        f"f32 mismatch vs reference, max abs err = {err_f32}"

    # --- bf16 weight streaming (recommended on v6e/v7x): tight structural check against a
    #     reference applying the identical mixed precision (bf16 MXU operands, f32 accumulation).
    params_bf16 = with_weight_dtype(params, jnp.bfloat16)
    out_bf16 = jax.block_until_ready(transformer_model(ids, params_bf16))
    ref_bf16 = reference(ids, params_bf16, matmul_dtype=jnp.bfloat16)
    err_bf16 = float(jnp.max(jnp.abs(out_bf16 - ref_bf16)))
    assert jnp.allclose(out_bf16, ref_bf16, atol=1e-3, rtol=1e-3), \
        f"bf16 mismatch vs mixed-precision reference, max abs err = {err_bf16}"

    print("KERNEL_OK")
</pallas_src>

<mosaic_0001>
module attributes {stable_mosaic.version = 11 : i64} {
  func.func @transformer_model_kernel(%arg0: i32, %arg1: memref<8x32xf32, #tpu.memory_space<vmem>>, %arg2: memref<1x32x16xf32, #tpu.memory_space<vmem>>, %arg3: memref<1x1x16xf32, #tpu.memory_space<vmem>>, %arg4: memref<1x32x16xf32, #tpu.memory_space<vmem>>, %arg5: memref<1x1x16xf32, #tpu.memory_space<vmem>>, %arg6: memref<1x32x16xf32, #tpu.memory_space<vmem>>, %arg7: memref<1x1x16xf32, #tpu.memory_space<vmem>>, %arg8: memref<1x16x32xf32, #tpu.memory_space<vmem>>, %arg9: memref<1x1x32xf32, #tpu.memory_space<vmem>>, %arg10: memref<1x32x64xf32, #tpu.memory_space<vmem>>, %arg11: memref<1x1x64xf32, #tpu.memory_space<vmem>>, %arg12: memref<1x64x32xf32, #tpu.memory_space<vmem>>, %arg13: memref<1x1x32xf32, #tpu.memory_space<vmem>>, %arg14: memref<8x32xf32, #tpu.memory_space<vmem>>) attributes {dimension_semantics = [#tpu.dimension_semantics<arbitrary>], iteration_bounds = array<i64: 3>, scalar_prefetch = 0 : i64, scratch_operands = 0 : i64, tpu.core_type = #tpu.core_type<tc>, window_params = [{pipeline_mode = #tpu.pipeline_mode<synchronous>, transform_indices = @transform_0, window_bounds = array<i64: 8, 32>}, {transform_indices = @transform_1, window_bounds = array<i64: 1, 32, 16>}, {transform_indices = @transform_2, window_bounds = array<i64: 1, 1, 16>}, {transform_indices = @transform_3, window_bounds = array<i64: 1, 32, 16>}, {transform_indices = @transform_4, window_bounds = array<i64: 1, 1, 16>}, {transform_indices = @transform_5, window_bounds = array<i64: 1, 32, 16>}, {transform_indices = @transform_6, window_bounds = array<i64: 1, 1, 16>}, {transform_indices = @transform_7, window_bounds = array<i64: 1, 16, 32>}, {transform_indices = @transform_8, window_bounds = array<i64: 1, 1, 32>}, {transform_indices = @transform_9, window_bounds = array<i64: 1, 32, 64>}, {transform_indices = @transform_10, window_bounds = array<i64: 1, 1, 64>}, {transform_indices = @transform_11, window_bounds = array<i64: 1, 64, 32>}, {transform_indices = @transform_12, window_bounds = array<i64: 1, 1, 32>}, {pipeline_mode = #tpu.pipeline_mode<synchronous>, transform_indices = @transform_13, window_bounds = array<i64: 8, 32>}]} {
    %c0_i32 = arith.constant 0 : i32
    %0 = arith.cmpi eq, %arg0, %c0_i32 : i32
    %1 = arith.extui %0 : i1 to i32
    %c0_i32_0 = arith.constant 0 : i32
    %2 = arith.cmpi ne, %1, %c0_i32_0 : i32
    scf.if %2 {
      %c0_50 = arith.constant 0 : index
      %c0_51 = arith.constant 0 : index
      %62 = vector.load %arg1[%c0_50, %c0_51] : memref<8x32xf32, #tpu.memory_space<vmem>>, vector<8x32xf32>
      %c0_52 = arith.constant 0 : index
      %c0_53 = arith.constant 0 : index
      %63 = vector.load %arg14[%c0_52, %c0_53] : memref<8x32xf32, #tpu.memory_space<vmem>>, vector<8x32xf32>
      tpu.vector_store %arg14[%c0_52, %c0_53], %62 {strides = array<i32>} : memref<8x32xf32, #tpu.memory_space<vmem>>, vector<8x32xf32>,
    } else {
    }
    %c0 = arith.constant 0 : index
    %c0_1 = arith.constant 0 : index
    %3 = vector.load %arg14[%c0, %c0_1] : memref<8x32xf32, #tpu.memory_space<vmem>>, vector<8x32xf32>
    %c0_2 = arith.constant 0 : index
    %c0_3 = arith.constant 0 : index
    %c0_4 = arith.constant 0 : index
    %4 = vector.load %arg2[%c0_2, %c0_3, %c0_4] : memref<1x32x16xf32, #tpu.memory_space<vmem>>, vector<1x32x16xf32>
    %5 = vector.shape_cast %4 : vector<1x32x16xf32> to vector<32x16xf32>
    %cst = arith.constant dense<0.000000e+00> : vector<8x16xf32>
    %6 = tpu.matmul %3, %5, %cst {dimension_numbers = #tpu.dot_dimension_numbers<[1], [0], [0], [1], [0, 0, 1, 1], [], []>} : vector<8x32xf32>, vector<32x16xf32>, vector<8x16xf32> -> vector<8x16xf32>
    %c0_5 = arith.constant 0 : index
    %c0_6 = arith.constant 0 : index
    %c0_7 = arith.constant 0 : index
    %7 = vector.load %arg3[%c0_5, %c0_6, %c0_7] : memref<1x1x16xf32, #tpu.memory_space<vmem>>, vector<1x1x16xf32>
    %8 = vector.shape_cast %7 : vector<1x1x16xf32> to vector<1x16xf32>
    %9 = vector.broadcast %8 : vector<1x16xf32> to vector<8x16xf32>
    %10 = arith.addf %6, %9 : vector<8x16xf32>
    %c0_8 = arith.constant 0 : index
    %c0_9 = arith.constant 0 : index
    %c0_10 = arith.constant 0 : index
    %11 = vector.load %arg4[%c0_8, %c0_9, %c0_10] : memref<1x32x16xf32, #tpu.memory_space<vmem>>, vector<1x32x16xf32>
    %12 = vector.shape_cast %11 : vector<1x32x16xf32> to vector<32x16xf32>
    %cst_11 = arith.constant dense<0.000000e+00> : vector<8x16xf32>
    %13 = tpu.matmul %3, %12, %cst_11 {dimension_numbers = #tpu.dot_dimension_numbers<[1], [0], [0], [1], [0, 0, 1, 1], [], []>} : vector<8x32xf32>, vector<32x16xf32>, vector<8x16xf32> -> vector<8x16xf32>
    %c0_12 = arith.constant 0 : index
    %c0_13 = arith.constant 0 : index
    %c0_14 = arith.constant 0 : index
    %14 = vector.load %arg5[%c0_12, %c0_13, %c0_14] : memref<1x1x16xf32, #tpu.memory_space<vmem>>, vector<1x1x16xf32>
    %15 = vector.shape_cast %14 : vector<1x1x16xf32> to vector<1x16xf32>
    %16 = vector.broadcast %15 : vector<1x16xf32> to vector<8x16xf32>
    %17 = arith.addf %13, %16 : vector<8x16xf32>
    %c0_15 = arith.constant 0 : index
    %c0_16 = arith.constant 0 : index
    %c0_17 = arith.constant 0 : index
    %18 = vector.load %arg6[%c0_15, %c0_16, %c0_17] : memref<1x32x16xf32, #tpu.memory_space<vmem>>, vector<1x32x16xf32>
    %19 = vector.shape_cast %18 : vector<1x32x16xf32> to vector<32x16xf32>
    %cst_18 = arith.constant dense<0.000000e+00> : vector<8x16xf32>
    %20 = tpu.matmul %3, %19, %cst_18 {dimension_numbers = #tpu.dot_dimension_numbers<[1], [0], [0], [1], [0, 0, 1, 1], [], []>} : vector<8x32xf32>, vector<32x16xf32>, vector<8x16xf32> -> vector<8x16xf32>
    %c0_19 = arith.constant 0 : index
    %c0_20 = arith.constant 0 : index
    %c0_21 = arith.constant 0 : index
    %21 = vector.load %arg7[%c0_19, %c0_20, %c0_21] : memref<1x1x16xf32, #tpu.memory_space<vmem>>, vector<1x1x16xf32>
    %22 = vector.shape_cast %21 : vector<1x1x16xf32> to vector<1x16xf32>
    %23 = vector.broadcast %22 : vector<1x16xf32> to vector<8x16xf32>
    %24 = arith.addf %20, %23 : vector<8x16xf32>
    %cst_22 = arith.constant dense<0.000000e+00> : vector<8x8xf32>
    %25 = tpu.matmul %10, %17, %cst_22 {dimension_numbers = #tpu.dot_dimension_numbers<[1], [1], [0], [0], [0, 0, 1, 0], [], []>} : vector<8x16xf32>, vector<8x16xf32>, vector<8x8xf32> -> vector<8x8xf32>
    %cst_23 = arith.constant dense<0xFF800000> : vector<8xf32>
    %26 = vector.multi_reduction <maximumf>, %25, %cst_23 [1] : vector<8x8xf32> to vector<8xf32>
    %27 = vector.shape_cast %26 : vector<8xf32> to vector<8x1xf32>
    %28 = vector.broadcast %27 : vector<8x1xf32> to vector<8x8xf32>
    %29 = arith.subf %25, %28 : vector<8x8xf32>
    %30 = math.exp %29 : vector<8x8xf32>
    %cst_24 = arith.constant dense<0.000000e+00> : vector<8xf32>
    %31 = vector.multi_reduction <add>, %30, %cst_24 [1] : vector<8x8xf32> to vector<8xf32>
    %32 = vector.shape_cast %31 : vector<8xf32> to vector<8x1xf32>
    %33 = vector.broadcast %32 : vector<8x1xf32> to vector<8x8xf32>
    %34 = arith.divf %30, %33 : vector<8x8xf32>
    %cst_25 = arith.constant dense<0.000000e+00> : vector<8x16xf32>
    %35 = tpu.matmul %34, %24, %cst_25 {dimension_numbers = #tpu.dot_dimension_numbers<[1], [0], [0], [1], [0, 0, 1, 1], [], []>} : vector<8x8xf32>, vector<8x16xf32>, vector<8x16xf32> -> vector<8x16xf32>
    %c0_26 = arith.constant 0 : index
    %c0_27 = arith.constant 0 : index
    %c0_28 = arith.constant 0 : index
    %36 = vector.load %arg8[%c0_26, %c0_27, %c0_28] : memref<1x16x32xf32, #tpu.memory_space<vmem>>, vector<1x16x32xf32>
    %37 = vector.shape_cast %36 : vector<1x16x32xf32> to vector<16x32xf32>
    %cst_29 = arith.constant dense<0.000000e+00> : vector<8x32xf32>
    %38 = tpu.matmul %35, %37, %cst_29 {dimension_numbers = #tpu.dot_dimension_numbers<[1], [0], [0], [1], [0, 0, 1, 1], [], []>} : vector<8x16xf32>, vector<16x32xf32>, vector<8x32xf32> -> vector<8x32xf32>
    %c0_30 = arith.constant 0 : index
    %c0_31 = arith.constant 0 : index
    %c0_32 = arith.constant 0 : index
    %39 = vector.load %arg9[%c0_30, %c0_31, %c0_32] : memref<1x1x32xf32, #tpu.memory_space<vmem>>, vector<1x1x32xf32>
    %40 = vector.shape_cast %39 : vector<1x1x32xf32> to vector<1x32xf32>
    %41 = vector.broadcast %40 : vector<1x32xf32> to vector<8x32xf32>
    %42 = arith.addf %38, %41 : vector<8x32xf32>
    %43 = arith.addf %3, %42 : vector<8x32xf32>
    %c0_33 = arith.constant 0 : index
    %c0_34 = arith.constant 0 : index
    %c0_35 = arith.constant 0 : index
    %44 = vector.load %arg10[%c0_33, %c0_34, %c0_35] : memref<1x32x64xf32, #tpu.memory_space<vmem>>, vector<1x32x64xf32>
    %45 = vector.shape_cast %44 : vector<1x32x64xf32> to vector<32x64xf32>
    %cst_36 = arith.constant dense<0.000000e+00> : vector<8x64xf32>
    %46 = tpu.matmul %43, %45, %cst_36 {dimension_numbers = #tpu.dot_dimension_numbers<[1], [0], [0], [1], [0, 0, 1, 1], [], []>} : vector<8x32xf32>, vector<32x64xf32>, vector<8x64xf32> -> vector<8x64xf32>
    %c0_37 = arith.constant 0 : index
    %c0_38 = arith.constant 0 : index
    %c0_39 = arith.constant 0 : index
    %47 = vector.load %arg11[%c0_37, %c0_38, %c0_39] : memref<1x1x64xf32, #tpu.memory_space<vmem>>, vector<1x1x64xf32>
    %48 = vector.shape_cast %47 : vector<1x1x64xf32> to vector<1x64xf32>
    %49 = vector.broadcast %48 : vector<1x64xf32> to vector<8x64xf32>
    %50 = arith.addf %46, %49 : vector<8x64xf32>
    %cst_40 = arith.constant 0.000000e+00 : f32
    %51 = vector.broadcast %cst_40 : f32 to vector<8x64xf32>
    %52 = arith.maximumf %50, %51 : vector<8x64xf32>
    %c0_41 = arith.constant 0 : index
    %c0_42 = arith.constant 0 : index
    %c0_43 = arith.constant 0 : index
    %53 = vector.load %arg12[%c0_41, %c0_42, %c0_43] : memref<1x64x32xf32, #tpu.memory_space<vmem>>, vector<1x64x32xf32>
    %54 = vector.shape_cast %53 : vector<1x64x32xf32> to vector<64x32xf32>
    %cst_44 = arith.constant dense<0.000000e+00> : vector<8x32xf32>
    %55 = tpu.matmul %52, %54, %cst_44 {dimension_numbers = #tpu.dot_dimension_numbers<[1], [0], [0], [1], [0, 0, 1, 1], [], []>} : vector<8x64xf32>, vector<64x32xf32>, vector<8x32xf32> -> vector<8x32xf32>
    %c0_45 = arith.constant 0 : index
    %c0_46 = arith.constant 0 : index
    %c0_47 = arith.constant 0 : index
    %56 = vector.load %arg13[%c0_45, %c0_46, %c0_47] : memref<1x1x32xf32, #tpu.memory_space<vmem>>, vector<1x1x32xf32>
    %57 = vector.shape_cast %56 : vector<1x1x32xf32> to vector<1x32xf32>
    %58 = vector.broadcast %57 : vector<1x32xf32> to vector<8x32xf32>
    %59 = arith.addf %55, %58 : vector<8x32xf32>
    %60 = arith.addf %43, %59 : vector<8x32xf32>
    %c0_48 = arith.constant 0 : index
    %c0_49 = arith.constant 0 : index
    %61 = vector.load %arg14[%c0_48, %c0_49] : memref<8x32xf32, #tpu.memory_space<vmem>>, vector<8x32xf32>
    tpu.vector_store %arg14[%c0_48, %c0_49], %60 {strides = array<i32>} : memref<8x32xf32, #tpu.memory_space<vmem>>, vector<8x32xf32>,
    return
  }
  func.func @transform_0(%arg0: i32) -> (i32, i32) {
    %c0_i32 = arith.constant 0 : i32
    %c0_i32_0 = arith.constant 0 : i32
    %c0_i32_1 = arith.constant 0 : i32
    return %c0_i32, %c0_i32_0 : i32, i32
  }
  func.func @transform_1(%arg0: i32) -> (i32, i32, i32) {
    %c0_i32 = arith.constant 0 : i32
    %c0_i32_0 = arith.constant 0 : i32
    %c0_i32_1 = arith.constant 0 : i32
    return %arg0, %c0_i32, %c0_i32_0 : i32, i32, i32
  }
  func.func @transform_2(%arg0: i32) -> (i32, i32, i32) {
    %c0_i32 = arith.constant 0 : i32
    %c0_i32_0 = arith.constant 0 : i32
    %c0_i32_1 = arith.constant 0 : i32
    return %arg0, %c0_i32, %c0_i32_0 : i32, i32, i32
  }
  func.func @transform_3(%arg0: i32) -> (i32, i32, i32) {
    %c0_i32 = arith.constant 0 : i32
    %c0_i32_0 = arith.constant 0 : i32
    %c0_i32_1 = arith.constant 0 : i32
    return %arg0, %c0_i32, %c0_i32_0 : i32, i32, i32
  }
  func.func @transform_4(%arg0: i32) -> (i32, i32, i32) {
    %c0_i32 = arith.constant 0 : i32
    %c0_i32_0 = arith.constant 0 : i32
    %c0_i32_1 = arith.constant 0 : i32
    return %arg0, %c0_i32, %c0_i32_0 : i32, i32, i32
  }
  func.func @transform_5(%arg0: i32) -> (i32, i32, i32) {
    %c0_i32 = arith.constant 0 : i32
    %c0_i32_0 = arith.constant 0 : i32
    %c0_i32_1 = arith.constant 0 : i32
    return %arg0, %c0_i32, %c0_i32_0 : i32, i32, i32
  }
  func.func @transform_6(%arg0: i32) -> (i32, i32, i32) {
    %c0_i32 = arith.constant 0 : i32
    %c0_i32_0 = arith.constant 0 : i32
    %c0_i32_1 = arith.constant 0 : i32
    return %arg0, %c0_i32, %c0_i32_0 : i32, i32, i32
  }
  func.func @transform_7(%arg0: i32) -> (i32, i32, i32) {
    %c0_i32 = arith.constant 0 : i32
    %c0_i32_0 = arith.constant 0 : i32
    %c0_i32_1 = arith.constant 0 : i32
    return %arg0, %c0_i32, %c0_i32_0 : i32, i32, i32
  }
  func.func @transform_8(%arg0: i32) -> (i32, i32, i32) {
    %c0_i32 = arith.constant 0 : i32
    %c0_i32_0 = arith.constant 0 : i32
    %c0_i32_1 = arith.constant 0 : i32
    return %arg0, %c0_i32, %c0_i32_0 : i32, i32, i32
  }
  func.func @transform_9(%arg0: i32) -> (i32, i32, i32) {
    %c0_i32 = arith.constant 0 : i32
    %c0_i32_0 = arith.constant 0 : i32
    %c0_i32_1 = arith.constant 0 : i32
    return %arg0, %c0_i32, %c0_i32_0 : i32, i32, i32
  }
  func.func @transform_10(%arg0: i32) -> (i32, i32, i32) {
    %c0_i32 = arith.constant 0 : i32
    %c0_i32_0 = arith.constant 0 : i32
    %c0_i32_1 = arith.constant 0 : i32
    return %arg0, %c0_i32, %c0_i32_0 : i32, i32, i32
  }
  func.func @transform_11(%arg0: i32) -> (i32, i32, i32) {
    %c0_i32 = arith.constant 0 : i32
    %c0_i32_0 = arith.constant 0 : i32
    %c0_i32_1 = arith.constant 0 : i32
    return %arg0, %c0_i32, %c0_i32_0 : i32, i32, i32
  }
  func.func @transform_12(%arg0: i32) -> (i32, i32, i32) {
    %c0_i32 = arith.constant 0 : i32
    %c0_i32_0 = arith.constant 0 : i32
    %c0_i32_1 = arith.constant 0 : i32
    return %arg0, %c0_i32, %c0_i32_0 : i32, i32, i32
  }
  func.func @transform_13(%arg0: i32) -> (i32, i32) {
    %c0_i32 = arith.constant 0 : i32
    %c0_i32_0 = arith.constant 0 : i32
    %c0_i32_1 = arith.constant 0 : i32
    return %c0_i32, %c0_i32_0 : i32, i32
  }
}

</mosaic_0001>

<llo_original>
// kernel: tpu_custom_call.1
$region0: #{tpu_custom_call.1}
  #allocation0 [shape = 'u32[]', space=smem, size = 0x4, offset = 0x4, fixed_abs, tag = 'smem constant byte address 0x4 - core index']
  #allocation1 [shape = 'u32[144,128]{1,0:T(1,128)}', space=vmem, size = 0x12000, scoped, tag = 'internal scratch']
  %s0 = inlined_call_operand.vmem [shape: f32[8,32], index: 0, kind: input, shape index: {}]
  %s1 = inlined_call_operand.vmem [shape: f32[3,32,16], index: 1, kind: input, shape index: {}]
  %s2 = inlined_call_operand.vmem [shape: f32[3,1,16], index: 2, kind: input, shape index: {}]
  %s3 = inlined_call_operand.vmem [shape: f32[3,32,16], index: 3, kind: input, shape index: {}]
  %s4 = inlined_call_operand.vmem [shape: f32[3,1,16], index: 4, kind: input, shape index: {}]
  %s5 = inlined_call_operand.vmem [shape: f32[3,32,16], index: 5, kind: input, shape index: {}]
  %s6 = inlined_call_operand.vmem [shape: f32[3,1,16], index: 6, kind: input, shape index: {}]
  %s7 = inlined_call_operand.vmem [shape: f32[3,16,32], index: 7, kind: input, shape index: {}]
  %s8 = inlined_call_operand.vmem [shape: f32[3,1,32], index: 8, kind: input, shape index: {}]
  %s9 = inlined_call_operand.vmem [shape: f32[3,32,64], index: 9, kind: input, shape index: {}]
  %s10 = inlined_call_operand.vmem [shape: f32[3,1,64], index: 10, kind: input, shape index: {}]
  %s11 = inlined_call_operand.vmem [shape: f32[3,64,32], index: 11, kind: input, shape index: {}]
  %s12 = inlined_call_operand.vmem [shape: f32[3,1,32], index: 12, kind: input, shape index: {}]
  %s13 = inlined_call_operand.hbm [shape: f32[8,32], index: 13, kind: output, shape index: {}]
  %s14 = sld [smem:[#allocation0]]
  $region89: #{tpu_custom_call.1} parent=0
    _
  %s16 = ssub.s32 1, %s14
  %s17 = scalar_select 0, %s16, %s14
  $region1: #{tpu_custom_call.1} parent=0
    #allocation2 [shape = 'u8[4096]{0}', space=vmem, size = 0x1000, scoped, tag = 'output window, operand 0, single buffered']
    #allocation3 [shape = 's32[2]{0}', space=sflag, size = 0x8, scoped, tag = 'scoped memory for tpu_custom_call.1']
    %18 = vsyncpa [#allocation3], 0
    loop: start=0, step=1, limit=5
    $region2: #{tpu_custom_call.1} parent=1 // loop_pre_header
      _
    $region3: #{tpu_custom_call.1} parent=1 // loop_header
      %s20 = sphi 0, %s24
      %p21 = scmp.ge.s32.totalorder %s20, 5
      %s28 = sphi 0, %s28
      %s30 = sphi 0, %s28
      %s31 = sphi 0, %s30
      %s45 = sphi 0, %s31
      %s51 = sphi 0, %s53
      %s54 = sphi 0, %s51
      %s55 = sphi 0, %s54
      %s71 = sphi 0, %s55
      %s77 = sphi 0, %s79
      %s80 = sphi 0, %s77
      %s81 = sphi 0, %s80
      %s97 = sphi 0, %s81
      %s103 = sphi 0, %s105
      %s106 = sphi 0, %s103
      %s107 = sphi 0, %s106
      %s123 = sphi 0, %s107
      %s129 = sphi 0, %s131
      %s132 = sphi 0, %s129
      %s133 = sphi 0, %s132
      %s149 = sphi 0, %s133
      %s155 = sphi 0, %s157
      %s158 = sphi 0, %s155
      %s159 = sphi 0, %s158
      %s175 = sphi 0, %s159
      %s181 = sphi 0, %s183
      %s184 = sphi 0, %s181
      %s185 = sphi 0, %s184
      %s201 = sphi 0, %s185
      %s207 = sphi 0, %s209
      %s210 = sphi 0, %s207
      %s211 = sphi 0, %s210
      %s227 = sphi 0, %s211
      %s233 = sphi 0, %s235
      %s236 = sphi 0, %s233
      %s237 = sphi 0, %s236
      %s253 = sphi 0, %s237
      %s259 = sphi 0, %s261
      %s262 = sphi 0, %s259
      %s263 = sphi 0, %s262
      %s279 = sphi 0, %s263
      %s285 = sphi 0, %s287
      %s288 = sphi 0, %s285
      %s289 = sphi 0, %s288
      %s305 = sphi 0, %s289
      %s311 = sphi 0, %s313
      %s314 = sphi 0, %s311
      %s315 = sphi 0, %s314
      %s331 = sphi 0, %s315
      %s337 = sphi 0, %s339
      %s340 = sphi 0, %s337
      %s341 = sphi 0, %s340
      %s357 = sphi 0, %s341
      %s361 = sphi 0, %s361
      %s363 = sphi 0, %s361
      %s364 = sphi 0, %s363
      %s378 = sphi 0, %s364
    $region4: #{tpu_custom_call.1} parent=1 // loop_header_branch
      %23 = sbr.rel (%p21) target = $region8
    $region5: #{tpu_custom_call.1} parent=1 // loop_body
      %s25 = ssub.s32 %s20, 1
      %s26 = ssub.s32 %s20, 2
      %s27 = sadd.s32 %s20, 1
      %s29 = sadd.s32 %s28, 1
      %p32 = scmp.eq.s32.totalorder %s20, 2
      %p33 = scmp.ne.s32.totalorder %s28, %s30
      %p34 = scmp.eq.s32.totalorder %s20, 0
      %p35 = por %p33, %p34
      %p36 = scmp.ne.s32.totalorder %s28, %s30
      %p37 = scmp.eq.s32.totalorder %s25, 2
      %p38 = por %p36, %p37
      %p39 = scmp.ne.s32.totalorder %s30, %s31
      %p40 = scmp.eq.s32.totalorder %s25, 0
      %p41 = por %p39, %p40
      %p42 = scmp.ne.s32.totalorder %s30, %s31
      %p43 = scmp.eq.s32.totalorder %s26, 2
      %p44 = por %p42, %p43
      %p46 = scmp.ne.s32.totalorder %s31, %s45
      %p47 = scmp.eq.s32.totalorder %s26, 0
      %p48 = por %p46, %p47
      %s49 = ssub.s32 %s20, %s27
      %p50 = scmp.eq.s32.totalorder %s49, 0
      %s52 = sadd.s32 %s51, 1
      %s53 = scalar_select %p50, %s51, %s52
      %p56 = pneg %p50
      %p57 = scmp.eq.s32.totalorder %s20, 2
      %p58 = por %p56, %p57
      %p59 = scmp.ne.s32.totalorder %s51, %s54
      %p60 = scmp.eq.s32.totalorder %s20, 0
      %p61 = por %p59, %p60
      %p62 = scmp.ne.s32.totalorder %s51, %s54
      %p63 = scmp.eq.s32.totalorder %s25, 2
      %p64 = por %p62, %p63
      %p65 = scmp.ne.s32.totalorder %s54, %s55
      %p66 = scmp.eq.s32.totalorder %s25, 0
      %p67 = por %p65, %p66
      %p68 = scmp.ne.s32.totalorder %s54, %s55
      %p69 = scmp.eq.s32.totalorder %s26, 2
      %p70 = por %p68, %p69
      %p72 = scmp.ne.s32.totalorder %s55, %s71
      %p73 = scmp.eq.s32.totalorder %s26, 0
      %p74 = por %p72, %p73
      %s75 = ssub.s32 %s20, %s27
      %p76 = scmp.eq.s32.totalorder %s75, 0
      %s78 = sadd.s32 %s77, 1
      %s79 = scalar_select %p76, %s77, %s78
      %p82 = pneg %p76
      %p83 = scmp.eq.s32.totalorder %s20, 2
      %p84 = por %p82, %p83
      %p85 = scmp.ne.s32.totalorder %s77, %s80
      %p86 = scmp.eq.s32.totalorder %s20, 0
      %p87 = por %p85, %p86
      %p88 = scmp.ne.s32.totalorder %s77, %s80
      %p89 = scmp.eq.s32.totalorder %s25, 2
      %p90 = por %p88, %p89
      %p91 = scmp.ne.s32.totalorder %s80, %s81
      %p92 = scmp.eq.s32.totalorder %s25, 0
      %p93 = por %p91, %p92
      %p94 = scmp.ne.s32.totalorder %s80, %s81
      %p95 = scmp.eq.s32.totalorder %s26, 2
      %p96 = por %p94, %p95
      %p98 = scmp.ne.s32.totalorder %s81, %s97
      %p99 = scmp.eq.s32.totalorder %s26, 0
      %p100 = por %p98, %p99
      %s101 = ssub.s32 %s20, %s27
      %p102 = scmp.eq.s32.totalorder %s101, 0
      %s104 = sadd.s32 %s103, 1
      %s105 = scalar_select %p102, %s103, %s104
      %p108 = pneg %p102
      %p109 = scmp.eq.s32.totalorder %s20, 2
      %p110 = por %p108, %p109
      %p111 = scmp.ne.s32.totalorder %s103, %s106
      %p112 = scmp.eq.s32.totalorder %s20, 0
      %p113 = por %p111, %p112
      %p114 = scmp.ne.s32.totalorder %s103, %s106
      %p115 = scmp.eq.s32.totalorder %s25, 2
      %p116 = por %p114, %p115
      %p117 = scmp.ne.s32.totalorder %s106, %s107
      %p118 = scmp.eq.s32.totalorder %s25, 0
      %p119 = por %p117, %p118
      %p120 = scmp.ne.s32.totalorder %s106, %s107
      %p121 = scmp.eq.s32.totalorder %s26, 2
      %p122 = por %p120, %p121
      %p124 = scmp.ne.s32.totalorder %s107, %s123
      %p125 = scmp.eq.s32.totalorder %s26, 0
      %p126 = por %p124, %p125
      %s127 = ssub.s32 %s20, %s27
      %p128 = scmp.eq.s32.totalorder %s127, 0
      %s130 = sadd.s32 %s129, 1
      %s131 = scalar_select %p128, %s129, %s130
      %p134 = pneg %p128
      %p135 = scmp.eq.s32.totalorder %s20, 2
      %p136 = por %p134, %p135
      %p137 = scmp.ne.s32.totalorder %s129, %s132
      %p138 = scmp.eq.s32.totalorder %s20, 0
      %p139 = por %p137, %p138
      %p140 = scmp.ne.s32.totalorder %s129, %s132
      %p141 = scmp.eq.s32.totalorder %s25, 2
      %p142 = por %p140, %p141
      %p143 = scmp.ne.s32.totalorder %s132, %s133
      %p144 = scmp.eq.s32.totalorder %s25, 0
      %p145 = por %p143, %p144
      %p146 = scmp.ne.s32.totalorder %s132, %s133
      %p147 = scmp.eq.s32.totalorder %s26, 2
      %p148 = por %p146, %p147
      %p150 = scmp.ne.s32.totalorder %s133, %s149
      %p151 = scmp.eq.s32.totalorder %s26, 0
      %p152 = por %p150, %p151
      %s153 = ssub.s32 %s20, %s27
      %p154 = scmp.eq.s32.totalorder %s153, 0
      %s156 = sadd.s32 %s155, 1
      %s157 = scalar_select %p154, %s155, %s156
      %p160 = pneg %p154
      %p161 = scmp.eq.s32.totalorder %s20, 2
      %p162 = por %p160, %p161
      %p163 = scmp.ne.s32.totalorder %s155, %s158
      %p164 = scmp.eq.s32.totalorder %s20, 0
      %p165 = por %p163, %p164
      %p166 = scmp.ne.s32.totalorder %s155, %s158
      %p167 = scmp.eq.s32.totalorder %s25, 2
      %p168 = por %p166, %p167
      %p169 = scmp.ne.s32.totalorder %s158, %s159
      %p170 = scmp.eq.s32.totalorder %s25, 0
      %p171 = por %p169, %p170
      %p172 = scmp.ne.s32.totalorder %s158, %s159
      %p173 = scmp.eq.s32.totalorder %s26, 2
      %p174 = por %p172, %p173
      %p176 = scmp.ne.s32.totalorder %s159, %s175
      %p177 = scmp.eq.s32.totalorder %s26, 0
      %p178 = por %p176, %p177
      %s179 = ssub.s32 %s20, %s27
      %p180 = scmp.eq.s32.totalorder %s179, 0
      %s182 = sadd.s32 %s181, 1
      %s183 = scalar_select %p180, %s181, %s182
      %p186 = pneg %p180
      %p187 = scmp.eq.s32.totalorder %s20, 2
      %p188 = por %p186, %p187
      %p189 = scmp.ne.s32.totalorder %s181, %s184
      %p190 = scmp.eq.s32.totalorder %s20, 0
      %p191 = por %p189, %p190
      %p192 = scmp.ne.s32.totalorder %s181, %s184
      %p193 = scmp.eq.s32.totalorder %s25, 2
      %p194 = por %p192, %p193
      %p195 = scmp.ne.s32.totalorder %s184, %s185
      %p196 = scmp.eq.s32.totalorder %s25, 0
      %p197 = por %p195, %p196
      %p198 = scmp.ne.s32.totalorder %s184, %s185
      %p199 = scmp.eq.s32.totalorder %s26, 2
      %p200 = por %p198, %p199
      %p202 = scmp.ne.s32.totalorder %s185, %s201
      %p203 = scmp.eq.s32.totalorder %s26, 0
      %p204 = por %p202, %p203
      %s205 = ssub.s32 %s20, %s27
      %p206 = scmp.eq.s32.totalorder %s205, 0
      %s208 = sadd.s32 %s207, 1
      %s209 = scalar_select %p206, %s207, %s208
      %p212 = pneg %p206
      %p213 = scmp.eq.s32.totalorder %s20, 2
      %p214 = por %p212, %p213
      %p215 = scmp.ne.s32.totalorder %s207, %s210
      %p216 = scmp.eq.s32.totalorder %s20, 0
      %p217 = por %p215, %p216
      %p218 = scmp.ne.s32.totalorder %s207, %s210
      %p219 = scmp.eq.s32.totalorder %s25, 2
      %p220 = por %p218, %p219
      %p221 = scmp.ne.s32.totalorder %s210, %s211
      %p222 = scmp.eq.s32.totalorder %s25, 0
      %p223 = por %p221, %p222
      %p224 = scmp.ne.s32.totalorder %s210, %s211
      %p225 = scmp.eq.s32.totalorder %s26, 2
      %p226 = por %p224, %p225
      %p228 = scmp.ne.s32.totalorder %s211, %s227
      %p229 = scmp.eq.s32.totalorder %s26, 0
      %p230 = por %p228, %p229
      %s231 = ssub.s32 %s20, %s27
      %p232 = scmp.eq.s32.totalorder %s231, 0
      %s234 = sadd.s32 %s233, 1
      %s235 = scalar_select %p232, %s233, %s234
      %p238 = pneg %p232
      %p239 = scmp.eq.s32.totalorder %s20, 2
      %p240 = por %p238, %p239
      %p241 = scmp.ne.s32.totalorder %s233, %s236
      %p242 = scmp.eq.s32.totalorder %s20, 0
      %p243 = por %p241, %p242
      %p244 = scmp.ne.s32.totalorder %s233, %s236
      %p245 = scmp.eq.s32.totalorder %s25, 2
      %p246 = por %p244, %p245
      %p247 = scmp.ne.s32.totalorder %s236, %s237
      %p248 = scmp.eq.s32.totalorder %s25, 0
      %p249 = por %p247, %p248
      %p250 = scmp.ne.s32.totalorder %s236, %s237
      %p251 = scmp.eq.s32.totalorder %s26, 2
      %p252 = por %p250, %p251
      %p254 = scmp.ne.s32.totalorder %s237, %s253
      %p255 = scmp.eq.s32.totalorder %s26, 0
      %p256 = por %p254, %p255
      %s257 = ssub.s32 %s20, %s27
      %p258 = scmp.eq.s32.totalorder %s257, 0
      %s260 = sadd.s32 %s259, 1
      %s261 = scalar_select %p258, %s259, %s260
      %p264 = pneg %p258
      %p265 = scmp.eq.s32.totalorder %s20, 2
      %p266 = por %p264, %p265
      %p267 = scmp.ne.s32.totalorder %s259, %s262
      %p268 = scmp.eq.s32.totalorder %s20, 0
      %p269 = por %p267, %p268
      %p270 = scmp.ne.s32.totalorder %s259, %s262
      %p271 = scmp.eq.s32.totalorder %s25, 2
      %p272 = por %p270, %p271
      %p273 = scmp.ne.s32.totalorder %s262, %s263
      %p274 = scmp.eq.s32.totalorder %s25, 0
      %p275 = por %p273, %p274
      %p276 = scmp.ne.s32.totalorder %s262, %s263
      %p277 = scmp.eq.s32.totalorder %s26, 2
      %p278 = por %p276, %p277
      %p280 = scmp.ne.s32.totalorder %s263, %s279
      %p281 = scmp.eq.s32.totalorder %s26, 0
      %p282 = por %p280, %p281
      %s283 = ssub.s32 %s20, %s27
      %p284 = scmp.eq.s32.totalorder %s283, 0
      %s286 = sadd.s32 %s285, 1
      %s287 = scalar_select %p284, %s285, %s286
      %p290 = pneg %p284
      %p291 = scmp.eq.s32.totalorder %s20, 2
      %p292 = por %p290, %p291
      %p293 = scmp.ne.s32.totalorder %s285, %s288
      %p294 = scmp.eq.s32.totalorder %s20, 0
      %p295 = por %p293, %p294
      %p296 = scmp.ne.s32.totalorder %s285, %s288
      %p297 = scmp.eq.s32.totalorder %s25, 2
      %p298 = por %p296, %p297
      %p299 = scmp.ne.s32.totalorder %s288, %s289
      %p300 = scmp.eq.s32.totalorder %s25, 0
      %p301 = por %p299, %p300
      %p302 = scmp.ne.s32.totalorder %s288, %s289
      %p303 = scmp.eq.s32.totalorder %s26, 2
      %p304 = por %p302, %p303
      %p306 = scmp.ne.s32.totalorder %s289, %s305
      %p307 = scmp.eq.s32.totalorder %s26, 0
      %p308 = por %p306, %p307
      %s309 = ssub.s32 %s20, %s27
      %p310 = scmp.eq.s32.totalorder %s309, 0
      %s312 = sadd.s32 %s311, 1
      %s313 = scalar_select %p310, %s311, %s312
      %p316 = pneg %p310
      %p317 = scmp.eq.s32.totalorder %s20, 2
      %p318 = por %p316, %p317
      %p319 = scmp.ne.s32.totalorder %s311, %s314
      %p320 = scmp.eq.s32.totalorder %s20, 0
      %p321 = por %p319, %p320
      %p322 = scmp.ne.s32.totalorder %s311, %s314
      %p323 = scmp.eq.s32.totalorder %s25, 2
      %p324 = por %p322, %p323
      %p325 = scmp.ne.s32.totalorder %s314, %s315
      %p326 = scmp.eq.s32.totalorder %s25, 0
      %p327 = por %p325, %p326
      %p328 = scmp.ne.s32.totalorder %s314, %s315
      %p329 = scmp.eq.s32.totalorder %s26, 2
      %p330 = por %p328, %p329
      %p332 = scmp.ne.s32.totalorder %s315, %s331
      %p333 = scmp.eq.s32.totalorder %s26, 0
      %p334 = por %p332, %p333
      %s335 = ssub.s32 %s20, %s27
      %p336 = scmp.eq.s32.totalorder %s335, 0
      %s338 = sadd.s32 %s337, 1
      %s339 = scalar_select %p336, %s337, %s338
      %p342 = pneg %p336
      %p343 = scmp.eq.s32.totalorder %s20, 2
      %p344 = por %p342, %p343
      %p345 = scmp.ne.s32.totalorder %s337, %s340
      %p346 = scmp.eq.s32.totalorder %s20, 0
      %p347 = por %p345, %p346
      %p348 = scmp.ne.s32.totalorder %s337, %s340
      %p349 = scmp.eq.s32.totalorder %s25, 2
      %p350 = por %p348, %p349
      %p351 = scmp.ne.s32.totalorder %s340, %s341
      %p352 = scmp.eq.s32.totalorder %s25, 0
      %p353 = por %p351, %p352
      %p354 = scmp.ne.s32.totalorder %s340, %s341
      %p355 = scmp.eq.s32.totalorder %s26, 2
      %p356 = por %p354, %p355
      %p358 = scmp.ne.s32.totalorder %s341, %s357
      %p359 = scmp.eq.s32.totalorder %s26, 0
      %p360 = por %p358, %p359
      %s362 = sadd.s32 %s361, 1
      %p365 = scmp.eq.s32.totalorder %s20, 2
      %p366 = scmp.ne.s32.totalorder %s361, %s363
      %p367 = scmp.eq.s32.totalorder %s20, 0
      %p368 = por %p366, %p367
      %p369 = scmp.ne.s32.totalorder %s361, %s363
      %p370 = scmp.eq.s32.totalorder %s25, 2
      %p371 = por %p369, %p370
      %p372 = scmp.ne.s32.totalorder %s363, %s364
      %p373 = scmp.eq.s32.totalorder %s25, 0
      %p374 = por %p372, %p373
      %p375 = scmp.ne.s32.totalorder %s363, %s364
      %p376 = scmp.eq.s32.totalorder %s26, 2
      %p377 = por %p375, %p376
      %p379 = scmp.ne.s32.totalorder %s364, %s378
      %p380 = scmp.eq.s32.totalorder %s26, 0
      %p381 = por %p379, %p380
      %p382 = scmp.le.s32.totalorder 1, %s20
      %p383 = scmp.lt.s32.totalorder %s20, 4
      %p384 = pnand %p382, %p383
      %p385 = pneg %p384
      // Predicated region
      $region9: #{tpu_custom_call.1} parent=5 // pred_check
        _
      $region10: #{tpu_custom_call.1} parent=5 // pred_check_branch
        %387 = sbr.rel (%p384) target = $region12
      $region11: #{tpu_custom_call.1} parent=5 // pred_region
        %s388 = ssub.s32 %s20, 1
        // Predicated region
        $region13: #{tpu_custom_call.1} parent=11 // pred_check
          %p389 = pneg %p41
        $region14: #{tpu_custom_call.1} parent=11 // pred_check_branch
          %391 = sbr.rel (%p389) target = $region16
        $region15: #{tpu_custom_call.1} parent=11 // pred_region
          _
        $region16: #{tpu_custom_call.1} parent=11 // pred_fallthru
          _
      $region12: #{tpu_custom_call.1} parent=5 // pred_fallthru
        _
      %p392 = scmp.lt.s32.totalorder %s20, 3
      // Predicated region
      $region17: #{tpu_custom_call.1} parent=5 // pred_check
        %p393 = pneg %p392
      $region18: #{tpu_custom_call.1} parent=5 // pred_check_branch
        %395 = sbr.rel (%p393) target = $region20
      $region19: #{tpu_custom_call.1} parent=5 // pred_region
        // Predicated region
        $region21: #{tpu_custom_call.1} parent=19 // pred_check
          %p396 = pneg %p61
        $region22: #{tpu_custom_call.1} parent=19 // pred_check_branch
          %398 = sbr.rel (%p396) target = $region24
        $region23: #{tpu_custom_call.1} parent=19 // pred_region
          %p399 = scmp.lt.s32.totalorder %s20, 2
          %s400 = scalar_select %p399, %s20, 2
          %s401 = smul.addr %s400, 4
          %s402 = smul.addr %s401, 8
          %s403 = scalar_lea.vmem %s1, %s402
        $region24: #{tpu_custom_call.1} parent=19 // pred_fallthru
          _
        // Predicated region
        $region25: #{tpu_custom_call.1} parent=19 // pred_check
          %p404 = pneg %p87
        $region26: #{tpu_custom_call.1} parent=19 // pred_check_branch
          %406 = sbr.rel (%p404) target = $region28
        $region27: #{tpu_custom_call.1} parent=19 // pred_region
          %p407 = scmp.lt.s32.totalorder %s20, 2
          %s408 = scalar_select %p407, %s20, 2
          %s409 = scalar_lea.vmem %s2, %s408
        $region28: #{tpu_custom_call.1} parent=19 // pred_fallthru
          _
        // Predicated region
        $region29: #{tpu_custom_call.1} parent=19 // pred_check
          %p410 = pneg %p113
        $region30: #{tpu_custom_call.1} parent=19 // pred_check_branch
          %412 = sbr.rel (%p410) target = $region32
        $region31: #{tpu_custom_call.1} parent=19 // pred_region
          %p413 = scmp.lt.s32.totalorder %s20, 2
          %s414 = scalar_select %p413, %s20, 2
          %s415 = smul.addr %s414, 4
          %s416 = smul.addr %s415, 8
          %s417 = scalar_lea.vmem %s3, %s416
        $region32: #{tpu_custom_call.1} parent=19 // pred_fallthru
          _
        // Predicated region
        $region33: #{tpu_custom_call.1} parent=19 // pred_check
          %p418 = pneg %p139
        $region34: #{tpu_custom_call.1} parent=19 // pred_check_branch
          %420 = sbr.rel (%p418) target = $region36
        $region35: #{tpu_custom_call.1} parent=19 // pred_region
          %p421 = scmp.lt.s32.totalorder %s20, 2
          %s422 = scalar_select %p421, %s20, 2
          %s423 = scalar_lea.vmem %s4, %s422
        $region36: #{tpu_custom_call.1} parent=19 // pred_fallthru
          _
        // Predicated region
        $region37: #{tpu_custom_call.1} parent=19 // pred_check
          %p424 = pneg %p165
        $region38: #{tpu_custom_call.1} parent=19 // pred_check_branch
          %426 = sbr.rel (%p424) target = $region40
        $region39: #{tpu_custom_call.1} parent=19 // pred_region
          %p427 = scmp.lt.s32.totalorder %s20, 2
          %s428 = scalar_select %p427, %s20, 2
          %s429 = smul.addr %s428, 4
          %s430 = smul.addr %s429, 8
          %s431 = scalar_lea.vmem %s5, %s430
        $region40: #{tpu_custom_call.1} parent=19 // pred_fallthru
          _
        // Predicated region
        $region41: #{tpu_custom_call.1} parent=19 // pred_check
          %p432 = pneg %p191
        $region42: #{tpu_custom_call.1} parent=19 // pred_check_branch
          %434 = sbr.rel (%p432) target = $region44
        $region43: #{tpu_custom_call.1} parent=19 // pred_region
          %p435 = scmp.lt.s32.totalorder %s20, 2
          %s436 = scalar_select %p435, %s20, 2
          %s437 = scalar_lea.vmem %s6, %s436
        $region44: #{tpu_custom_call.1} parent=19 // pred_fallthru
          _
        // Predicated region
        $region45: #{tpu_custom_call.1} parent=19 // pred_check
          %p438 = pneg %p217
        $region46: #{tpu_custom_call.1} parent=19 // pred_check_branch
          %440 = sbr.rel (%p438) target = $region48
        $region47: #{tpu_custom_call.1} parent=19 // pred_region
          %p441 = scmp.lt.s32.totalorder %s20, 2
          %s442 = scalar_select %p441, %s20, 2
          %s443 = smul.addr %s442, 2
          %s444 = smul.addr %s443, 8
          %s445 = scalar_lea.vmem %s7, %s444
        $region48: #{tpu_custom_call.1} parent=19 // pred_fallthru
          _
        // Predicated region
        $region49: #{tpu_custom_call.1} parent=19 // pred_check
          %p446 = pneg %p243
        $region50: #{tpu_custom_call.1} parent=19 // pred_check_branch
          %448 = sbr.rel (%p446) target = $region52
        $region51: #{tpu_custom_call.1} parent=19 // pred_region
          %p449 = scmp.lt.s32.totalorder %s20, 2
          %s450 = scalar_select %p449, %s20, 2
          %s451 = scalar_lea.vmem %s8, %s450
        $region52: #{tpu_custom_call.1} parent=19 // pred_fallthru
          _
        // Predicated region
        $region53: #{tpu_custom_call.1} parent=19 // pred_check
          %p452 = pneg %p269
        $region54: #{tpu_custom_call.1} parent=19 // pred_check_branch
          %454 = sbr.rel (%p452) target = $region56
        $region55: #{tpu_custom_call.1} parent=19 // pred_region
          %p455 = scmp.lt.s32.totalorder %s20, 2
          %s456 = scalar_select %p455, %s20, 2
          %s457 = smul.addr %s456, 4
          %s458 = smul.addr %s457, 8
          %s459 = scalar_lea.vmem %s9, %s458
        $region56: #{tpu_custom_call.1} parent=19 // pred_fallthru
          _
        // Predicated region
        $region57: #{tpu_custom_call.1} parent=19 // pred_check
          %p460 = pneg %p295
        $region58: #{tpu_custom_call.1} parent=19 // pred_check_branch
          %462 = sbr.rel (%p460) target = $region60
        $region59: #{tpu_custom_call.1} parent=19 // pred_region
          %p463 = scmp.lt.s32.totalorder %s20, 2
          %s464 = scalar_select %p463, %s20, 2
          %s465 = scalar_lea.vmem %s10, %s464
        $region60: #{tpu_custom_call.1} parent=19 // pred_fallthru
          _
        // Predicated region
        $region61: #{tpu_custom_call.1} parent=19 // pred_check
          %p466 = pneg %p321
        $region62: #{tpu_custom_call.1} parent=19 // pred_check_branch
          %468 = sbr.rel (%p466) target = $region64
        $region63: #{tpu_custom_call.1} parent=19 // pred_region
          %p469 = scmp.lt.s32.totalorder %s20, 2
          %s470 = scalar_select %p469, %s20, 2
          %s471 = smul.addr %s470, 8
          %s472 = smul.addr %s471, 8
          %s473 = scalar_lea.vmem %s11, %s472
        $region64: #{tpu_custom_call.1} parent=19 // pred_fallthru
          _
        // Predicated region
        $region65: #{tpu_custom_call.1} parent=19 // pred_check
          %p474 = pneg %p347
        $region66: #{tpu_custom_call.1} parent=19 // pred_check_branch
          %476 = sbr.rel (%p474) target = $region68
        $region67: #{tpu_custom_call.1} parent=19 // pred_region
          %p477 = scmp.lt.s32.totalorder %s20, 2
          %s478 = scalar_select %p477, %s20, 2
          %s479 = scalar_lea.vmem %s12, %s478
        $region68: #{tpu_custom_call.1} parent=19 // pred_fallthru
          _
      $region20: #{tpu_custom_call.1} parent=5 // pred_fallthru
        _
      %p480 = scmp.le.s32.totalorder 1, %s20
      %p481 = scmp.lt.s32.totalorder %s20, 4
      %p482 = pnand %p480, %p481
      %p483 = pneg %p482
      // Predicated region
      $region69: #{tpu_custom_call.1} parent=5 // pred_check
        _
      $region70: #{tpu_custom_call.1} parent=5 // pred_check_branch
        %485 = sbr.rel (%p482) target = $region72
      $region71: #{tpu_custom_call.1} parent=5 // pred_region
        %s486 = ssub.s32 %s20, 1
        %p487 = pneg %p41
        %p488 = pneg %p38
        %p489 = scmp.lt.s32.totalorder %s25, 2
        %s490 = scalar_select %p489, %s25, 2
        %s491 = smul.addr %s490, 4
        %s492 = smul.addr %s491, 8
        %s493 = scalar_lea.vmem %s1, %s492
        %p494 = pneg %p67
        %p495 = pneg %p64
        %p496 = scmp.lt.s32.totalorder %s25, 2
        %s497 = scalar_select %p496, %s25, 2
        %s498 = scalar_lea.vmem %s2, %s497
        %p499 = pneg %p93
        %p500 = pneg %p90
        %p501 = scmp.lt.s32.totalorder %s25, 2
        %s502 = scalar_select %p501, %s25, 2
        %s503 = smul.addr %s502, 4
        %s504 = smul.addr %s503, 8
        %s505 = scalar_lea.vmem %s3, %s504
        %p506 = pneg %p119
        %p507 = pneg %p116
        %p508 = scmp.lt.s32.totalorder %s25, 2
        %s509 = scalar_select %p508, %s25, 2
        %s510 = scalar_lea.vmem %s4, %s509
        %p511 = pneg %p145
        %p512 = pneg %p142
        %p513 = scmp.lt.s32.totalorder %s25, 2
        %s514 = scalar_select %p513, %s25, 2
        %s515 = smul.addr %s514, 4
        %s516 = smul.addr %s515, 8
        %s517 = scalar_lea.vmem %s5, %s516
        %p518 = pneg %p171
        %p519 = pneg %p168
        %p520 = scmp.lt.s32.totalorder %s25, 2
        %s521 = scalar_select %p520, %s25, 2
        %s522 = scalar_lea.vmem %s6, %s521
        %p523 = pneg %p197
        %p524 = pneg %p194
        %p525 = scmp.lt.s32.totalorder %s25, 2
        %s526 = scalar_select %p525, %s25, 2
        %s527 = smul.addr %s526, 2
        %s528 = smul.addr %s527, 8
        %s529 = scalar_lea.vmem %s7, %s528
        %p530 = pneg %p223
        %p531 = pneg %p220
        %p532 = scmp.lt.s32.totalorder %s25, 2
        %s533 = scalar_select %p532, %s25, 2
        %s534 = scalar_lea.vmem %s8, %s533
        %p535 = pneg %p249
        %p536 = pneg %p246
        %p537 = scmp.lt.s32.totalorder %s25, 2
        %s538 = scalar_select %p537, %s25, 2
        %s539 = smul.addr %s538, 4
        %s540 = smul.addr %s539, 8
        %s541 = scalar_lea.vmem %s9, %s540
        %p542 = pneg %p275
        %p543 = pneg %p272
        %p544 = scmp.lt.s32.totalorder %s25, 2
        %s545 = scalar_select %p544, %s25, 2
        %s546 = scalar_lea.vmem %s10, %s545
        %p547 = pneg %p301
        %p548 = pneg %p298
        %p549 = scmp.lt.s32.totalorder %s25, 2
        %s550 = scalar_select %p549, %s25, 2
        %s551 = smul.addr %s550, 8
        %s552 = smul.addr %s551, 8
        %s553 = scalar_lea.vmem %s11, %s552
        %p554 = pneg %p327
        %p555 = pneg %p324
        %p556 = scmp.lt.s32.totalorder %s25, 2
        %s557 = scalar_select %p556, %s25, 2
        %s558 = scalar_lea.vmem %s12, %s557
        %p559 = pneg %p353
        %p560 = pneg %p350
        %p561 = pneg %p374
        %p562 = pneg %p371
        %p563 = scmp.lt.s32.totalorder %s25, 2
        %s564 = scalar_select %p563, %s25, 2
        %s565 = smul.addr %s564, 4
        %s566 = smul.addr %s565, 8
        %s567 = scalar_lea.vmem %s1, %s566
        %p568 = scmp.lt.s32.totalorder %s25, 2
        %s569 = scalar_select %p568, %s25, 2
        %s570 = scalar_lea.vmem %s2, %s569
        %p571 = scmp.lt.s32.totalorder %s25, 2
        %s572 = scalar_select %p571, %s25, 2
        %s573 = smul.addr %s572, 4
        %s574 = smul.addr %s573, 8
        %s575 = scalar_lea.vmem %s3, %s574
        %p576 = scmp.lt.s32.totalorder %s25, 2
        %s577 = scalar_select %p576, %s25, 2
        %s578 = scalar_lea.vmem %s4, %s577
        %p579 = scmp.lt.s32.totalorder %s25, 2
        %s580 = scalar_select %p579, %s25, 2
        %s581 = smul.addr %s580, 4
        %s582 = smul.addr %s581, 8
        %s583 = scalar_lea.vmem %s5, %s582
        %p584 = scmp.lt.s32.totalorder %s25, 2
        %s585 = scalar_select %p584, %s25, 2
        %s586 = scalar_lea.vmem %s6, %s585
        %p587 = scmp.lt.s32.totalorder %s25, 2
        %s588 = scalar_select %p587, %s25, 2
        %s589 = smul.addr %s588, 2
        %s590 = smul.addr %s589, 8
        %s591 = scalar_lea.vmem %s7, %s590
        %p592 = scmp.lt.s32.totalorder %s25, 2
        %s593 = scalar_select %p592, %s25, 2
        %s594 = scalar_lea.vmem %s8, %s593
        %p595 = scmp.lt.s32.totalorder %s25, 2
        %s596 = scalar_select %p595, %s25, 2
        %s597 = smul.addr %s596, 4
        %s598 = smul.addr %s597, 8
        %s599 = scalar_lea.vmem %s9, %s598
        %p600 = scmp.lt.s32.totalorder %s25, 2
        %s601 = scalar_select %p600, %s25, 2
        %s602 = scalar_lea.vmem %s10, %s601
        %p603 = scmp.lt.s32.totalorder %s25, 2
        %s604 = scalar_select %p603, %s25, 2
        %s605 = smul.addr %s604, 8
        %s606 = smul.addr %s605, 8
        %s607 = scalar_lea.vmem %s11, %s606
        %p608 = scmp.lt.s32.totalorder %s25, 2
        %s609 = scalar_select %p608, %s25, 2
        %s610 = scalar_lea.vmem %s12, %s609
        %p611 = scmp.eq.s32.totalorder %s25, 0
        // Predicated region
        $region73: #{tpu_custom_call.1} parent=71 // pred_check
          %p612 = pneg %p611
        $region74: #{tpu_custom_call.1} parent=71 // pred_check_branch
          %614 = sbr.rel (%p612) target = $region76
        $region75: #{tpu_custom_call.1} parent=71 // pred_region
          %v615 = vld [vmem:[%s0] sm:$0xff]
          %vm616 = vcmask 261120
          %617 = vst.msk [vmem:[#allocation2] sm:$0xff] %vm616, %v615
        $region76: #{tpu_custom_call.1} parent=71 // pred_fallthru
          _
        %v618 = vld [vmem:[#allocation2] sm:$0xff]
        %v619 = vld [vmem:[%s567] sm:$0xff]
        %v620 = vld [vmem:[%s567 + $0x8] sm:$0xff]
        %v621 = vld [vmem:[%s567 + $0x10] sm:$0xff]
        %v622 = vld [vmem:[%s567 + $0x18] sm:$0xff]
        %v623 = vld [vmem:[%s570] sm:$0x1]
        %v625 = vlaneseq
        %v626 = vshrl.u32 %v625, 7
        %v627 = vsub.s32 0, %v626
        %v628 = vrot.slane %v623, %v627
        %vm630 = vcmask 261120
        %v632 = vsel %vm630, %v618, 0
        %634 = vmatprep.subr.mxu0 0.0
        %635 = vmatpush1.msra.mxu0 %v619
        %636 = vmatprep.subr.mxu0 0.0
        %637 = vmatpush1.msra.mxu0 %v620
        %638 = vmatprep.subr.mxu0 0.0
        %639 = vmatpush1.msra.mxu0 %v621
        %640 = vmatprep.subr.mxu0 0.0
        %641 = vmatpush1.msra.mxu0 %v622
        %642 = vmatprep.subr.mxu0 0.0
        %643 = vmatpush1.msra.mxu0 0.0
        %644 = vmatprep.subr.mxu0 0.0
        %645 = vmatpush1.msra.mxu0 0.0
        %646 = vmatprep.subr.mxu0 0.0
        %647 = vmatpush1.msra.mxu0 0.0
        %648 = vmatprep.subr.mxu0 0.0
        %649 = vmatpush1.msra.mxu0 0.0
        %650 = vmatprep.subr.mxu0 0.0
        %651 = vmatpush1.msra.mxu0 0.0
        %652 = vmatprep.subr.mxu0 0.0
        %653 = vmatpush1.msra.mxu0 0.0
        %654 = vmatprep.subr.mxu0 0.0
        %655 = vmatpush1.msra.mxu0 0.0
        %656 = vmatprep.subr.mxu0 0.0
        %657 = vmatpush1.msra.mxu0 0.0
        %658 = vmatprep.subr.mxu0 0.0
        %659 = vmatpush1.msra.mxu0 0.0
        %660 = vmatprep.subr.mxu0 0.0
        %661 = vmatpush1.msra.mxu0 0.0
        %662 = vmatprep.subr.mxu0 0.0
        %663 = vmatpush1.msra.mxu0 0.0
        %664 = vmatprep.subr.mxu0 0.0
        %665 = vmatpush1.msra.mxu0 0.0
        %666 = vmatprep.subr.mxu0 0.0
        %667 = vmatpush1.msra.mxu0 0.0
        %668 = vmatprep.subr.mxu0 0.0
        %669 = vmatpush1.msra.mxu0 0.0
        %670 = vmatprep.subr.mxu0 0.0
        %671 = vmatpush1.msra.mxu0 0.0
        %672 = vmatprep.subr.mxu0 0.0
        %673 = vmatpush1.msra.mxu0 0.0
        %674 = vmatprep.subr.mxu0 0.0
        %675 = vmatpush1.msra.mxu0 0.0
        %676 = vmatprep.subr.mxu0 0.0
        %677 = vmatpush1.msra.mxu0 0.0
        %678 = vmatprep.subr.mxu0 0.0
        %679 = vmatpush1.msra.mxu0 0.0
        %680 = vmatprep.subr.mxu0 0.0
        %681 = vmatpush1.msra.mxu0 0.0
        %682 = vmatprep.subr.mxu0 0.0
        %683 = vmatpush1.msra.mxu0 0.0
        %684 = vmatprep.subr.mxu0 0.0
        %685 = vmatpush1.msra.mxu0 0.0
        %686 = vmatprep.subr.mxu0 0.0
        %687 = vmatpush1.msra.mxu0 0.0
        %688 = vmatprep.subr.mxu0 0.0
        %689 = vmatpush1.msra.mxu0 0.0
        %690 = vmatprep.subr.mxu0 0.0
        %691 = vmatpush1.msra.mxu0 0.0
        %692 = vmatprep.subr.mxu0 0.0
        %693 = vmatpush1.msra.mxu0 0.0
        %694 = vmatprep.subr.mxu0 0.0
        %695 = vmatpush1.msra.mxu0 0.0
        %696 = vmatprep.subr.mxu0 0.0
        %697 = vmatpush1.msra.mxu0 0.0
        %698 = vmatprep.mubr.f32.mxu0 0.0
        %699 = vmatmul.mubr.f32.gmra.mrb[0].mxu0 %v632
        %v700 = vpop.f32.mrb[0].mxu0
        %v701 = vadd.f32 %v628, %v700
        %v702 = vpop.f32.mrb[0].mxu0
        %703 = vdwg.mxu0
        %v704 = vld [vmem:[%s575] sm:$0xff]
        %v705 = vld [vmem:[%s575 + $0x8] sm:$0xff]
        %v706 = vld [vmem:[%s575 + $0x10] sm:$0xff]
        %v707 = vld [vmem:[%s575 + $0x18] sm:$0xff]
        %v708 = vld [vmem:[%s578] sm:$0x1]
        %v710 = vlaneseq
        %v711 = vshrl.u32 %v710, 7
        %v712 = vsub.s32 0, %v711
        %v713 = vrot.slane %v708, %v712
        %715 = vmatprep.subr.mxu0 0.0
        %716 = vmatpush1.msra.mxu0 %v704
        %717 = vmatprep.subr.mxu0 0.0
        %718 = vmatpush1.msra.mxu0 %v705
        %719 = vmatprep.subr.mxu0 0.0
        %720 = vmatpush1.msra.mxu0 %v706
        %721 = vmatprep.subr.mxu0 0.0
        %722 = vmatpush1.msra.mxu0 %v707
        %723 = vmatprep.subr.mxu0 0.0
        %724 = vmatpush1.msra.mxu0 0.0
        %725 = vmatprep.subr.mxu0 0.0
        %726 = vmatpush1.msra.mxu0 0.0
        %727 = vmatprep.subr.mxu0 0.0
        %728 = vmatpush1.msra.mxu0 0.0
        %729 = vmatprep.subr.mxu0 0.0
        %730 = vmatpush1.msra.mxu0 0.0
        %731 = vmatprep.subr.mxu0 0.0
        %732 = vmatpush1.msra.mxu0 0.0
        %733 = vmatprep.subr.mxu0 0.0
        %734 = vmatpush1.msra.mxu0 0.0
        %735 = vmatprep.subr.mxu0 0.0
        %736 = vmatpush1.msra.mxu0 0.0
        %737 = vmatprep.subr.mxu0 0.0
        %738 = vmatpush1.msra.mxu0 0.0
        %739 = vmatprep.subr.mxu0 0.0
        %740 = vmatpush1.msra.mxu0 0.0
        %741 = vmatprep.subr.mxu0 0.0
        %742 = vmatpush1.msra.mxu0 0.0
        %743 = vmatprep.subr.mxu0 0.0
        %744 = vmatpush1.msra.mxu0 0.0
        %745 = vmatprep.subr.mxu0 0.0
        %746 = vmatpush1.msra.mxu0 0.0
        %747 = vmatprep.subr.mxu0 0.0
        %748 = vmatpush1.msra.mxu0 0.0
        %749 = vmatprep.subr.mxu0 0.0
        %750 = vmatpush1.msra.mxu0 0.0
        %751 = vmatprep.subr.mxu0 0.0
        %752 = vmatpush1.msra.mxu0 0.0
        %753 = vmatprep.subr.mxu0 0.0
        %754 = vmatpush1.msra.mxu0 0.0
        %755 = vmatprep.subr.mxu0 0.0
        %756 = vmatpush1.msra.mxu0 0.0
        %757 = vmatprep.subr.mxu0 0.0
        %758 = vmatpush1.msra.mxu0 0.0
        %759 = vmatprep.subr.mxu0 0.0
        %760 = vmatpush1.msra.mxu0 0.0
        %761 = vmatprep.subr.mxu0 0.0
        %762 = vmatpush1.msra.mxu0 0.0
        %763 = vmatprep.subr.mxu0 0.0
        %764 = vmatpush1.msra.mxu0 0.0
        %765 = vmatprep.subr.mxu0 0.0
        %766 = vmatpush1.msra.mxu0 0.0
        %767 = vmatprep.subr.mxu0 0.0
        %768 = vmatpush1.msra.mxu0 0.0
        %769 = vmatprep.subr.mxu0 0.0
        %770 = vmatpush1.msra.mxu0 0.0
        %771 = vmatprep.subr.mxu0 0.0
        %772 = vmatpush1.msra.mxu0 0.0
        %773 = vmatprep.subr.mxu0 0.0
        %774 = vmatpush1.msra.mxu0 0.0
        %775 = vmatprep.subr.mxu0 0.0
        %776 = vmatpush1.msra.mxu0 0.0
        %777 = vmatprep.subr.mxu0 0.0
        %778 = vmatpush1.msra.mxu0 0.0
        %779 = vmatprep.mubr.f32.mxu0 0.0
        %780 = vmatmul.mubr.f32.gmra.mrb[0].mxu0 %v632
        %v781 = vpop.f32.mrb[0].mxu0
        %v782 = vadd.f32 %v713, %v781
        %v783 = vpop.f32.mrb[0].mxu0
        %784 = vdwg.mxu0
        %v785 = vld [vmem:[%s583] sm:$0xff]
        %v786 = vld [vmem:[%s583 + $0x8] sm:$0xff]
        %v787 = vld [vmem:[%s583 + $0x10] sm:$0xff]
        %v788 = vld [vmem:[%s583 + $0x18] sm:$0xff]
        %v789 = vld [vmem:[%s586] sm:$0x1]
        %v791 = vlaneseq
        %v792 = vshrl.u32 %v791, 7
        %v793 = vsub.s32 0, %v792
        %v794 = vrot.slane %v789, %v793
        %796 = vmatprep.subr.mxu0 0.0
        %797 = vmatpush1.msra.mxu0 %v785
        %798 = vmatprep.subr.mxu0 0.0
        %799 = vmatpush1.msra.mxu0 %v786
        %800 = vmatprep.subr.mxu0 0.0
        %801 = vmatpush1.msra.mxu0 %v787
        %802 = vmatprep.subr.mxu0 0.0
        %803 = vmatpush1.msra.mxu0 %v788
        %804 = vmatprep.subr.mxu0 0.0
        %805 = vmatpush1.msra.mxu0 0.0
        %806 = vmatprep.subr.mxu0 0.0
        %807 = vmatpush1.msra.mxu0 0.0
        %808 = vmatprep.subr.mxu0 0.0
        %809 = vmatpush1.msra.mxu0 0.0
        %810 = vmatprep.subr.mxu0 0.0
        %811 = vmatpush1.msra.mxu0 0.0
        %812 = vmatprep.subr.mxu0 0.0
        %813 = vmatpush1.msra.mxu0 0.0
        %814 = vmatprep.subr.mxu0 0.0
        %815 = vmatpush1.msra.mxu0 0.0
        %816 = vmatprep.subr.mxu0 0.0
        %817 = vmatpush1.msra.mxu0 0.0
        %818 = vmatprep.subr.mxu0 0.0
        %819 = vmatpush1.msra.mxu0 0.0
        %820 = vmatprep.subr.mxu0 0.0
        %821 = vmatpush1.msra.mxu0 0.0
        %822 = vmatprep.subr.mxu0 0.0
        %823 = vmatpush1.msra.mxu0 0.0
        %824 = vmatprep.subr.mxu0 0.0
        %825 = vmatpush1.msra.mxu0 0.0
        %826 = vmatprep.subr.mxu0 0.0
        %827 = vmatpush1.msra.mxu0 0.0
        %828 = vmatprep.subr.mxu0 0.0
        %829 = vmatpush1.msra.mxu0 0.0
        %830 = vmatprep.subr.mxu0 0.0
        %831 = vmatpush1.msra.mxu0 0.0
        %832 = vmatprep.subr.mxu0 0.0
        %833 = vmatpush1.msra.mxu0 0.0
        %834 = vmatprep.subr.mxu0 0.0
        %835 = vmatpush1.msra.mxu0 0.0
        %836 = vmatprep.subr.mxu0 0.0
        %837 = vmatpush1.msra.mxu0 0.0
        %838 = vmatprep.subr.mxu0 0.0
        %839 = vmatpush1.msra.mxu0 0.0
        %840 = vmatprep.subr.mxu0 0.0
        %841 = vmatpush1.msra.mxu0 0.0
        %842 = vmatprep.subr.mxu0 0.0
        %843 = vmatpush1.msra.mxu0 0.0
        %844 = vmatprep.subr.mxu0 0.0
        %845 = vmatpush1.msra.mxu0 0.0
        %846 = vmatprep.subr.mxu0 0.0
        %847 = vmatpush1.msra.mxu0 0.0
        %848 = vmatprep.subr.mxu0 0.0
        %849 = vmatpush1.msra.mxu0 0.0
        %850 = vmatprep.subr.mxu0 0.0
        %851 = vmatpush1.msra.mxu0 0.0
        %852 = vmatprep.subr.mxu0 0.0
        %853 = vmatpush1.msra.mxu0 0.0
        %854 = vmatprep.subr.mxu0 0.0
        %855 = vmatpush1.msra.mxu0 0.0
        %856 = vmatprep.subr.mxu0 0.0
        %857 = vmatpush1.msra.mxu0 0.0
        %858 = vmatprep.subr.mxu0 0.0
        %859 = vmatpush1.msra.mxu0 0.0
        %860 = vmatprep.mubr.f32.mxu0 0.0
        %861 = vmatmul.mubr.f32.gmra.mrb[0].mxu0 %v632
        %v862 = vpop.f32.mrb[0].mxu0
        %v863 = vadd.f32 %v794, %v862
        %v864 = vpop.f32.mrb[0].mxu0
        %865 = vdwg.mxu0
        %vm866 = vcmask 130048
        %v868 = vsel %vm866, %v701, 0
        %v871 = vsel %vm866, %v782, 0
        %873 = vmatprep.subr.mxu0 0.0
        %874 = vmatpush1.xpose.msra.mxu0 %v871
        %875 = vmatprep.subr.mxu0 0.0
        %876 = vmatpush1.xpose.msra.mxu0 0.0
        %877 = vmatprep.subr.mxu0 0.0
        %878 = vmatpush1.xpose.msra.mxu0 0.0
        %879 = vmatprep.subr.mxu0 0.0
        %880 = vmatpush1.xpose.msra.mxu0 0.0
        %881 = vmatprep.subr.mxu0 0.0
        %882 = vmatpush1.xpose.msra.mxu0 0.0
        %883 = vmatprep.subr.mxu0 0.0
        %884 = vmatpush1.xpose.msra.mxu0 0.0
        %885 = vmatprep.subr.mxu0 0.0
        %886 = vmatpush1.xpose.msra.mxu0 0.0
        %887 = vmatprep.subr.mxu0 0.0
        %888 = vmatpush1.xpose.msra.mxu0 0.0
        %889 = vmatprep.subr.mxu0 0.0
        %890 = vmatpush1.xpose.msra.mxu0 0.0
        %891 = vmatprep.subr.mxu0 0.0
        %892 = vmatpush1.xpose.msra.mxu0 0.0
        %893 = vmatprep.subr.mxu0 0.0
        %894 = vmatpush1.xpose.msra.mxu0 0.0
        %895 = vmatprep.subr.mxu0 0.0
        %896 = vmatpush1.xpose.msra.mxu0 0.0
        %897 = vmatprep.subr.mxu0 0.0
        %898 = vmatpush1.xpose.msra.mxu0 0.0
        %899 = vmatprep.subr.mxu0 0.0
        %900 = vmatpush1.xpose.msra.mxu0 0.0
        %901 = vmatprep.subr.mxu0 0.0
        %902 = vmatpush1.xpose.msra.mxu0 0.0
        %903 = vmatprep.subr.mxu0 0.0
        %904 = vmatpush1.xpose.msra.mxu0 0.0
        %905 = vmatprep.subr.mxu0 0.0
        %906 = vmatpush1.xpose.msra.mxu0 0.0
        %907 = vmatprep.subr.mxu0 0.0
        %908 = vmatpush1.xpose.msra.mxu0 0.0
        %909 = vmatprep.subr.mxu0 0.0
        %910 = vmatpush1.xpose.msra.mxu0 0.0
        %911 = vmatprep.subr.mxu0 0.0
        %912 = vmatpush1.xpose.msra.mxu0 0.0
        %913 = vmatprep.subr.mxu0 0.0
        %914 = vmatpush1.xpose.msra.mxu0 0.0
        %915 = vmatprep.subr.mxu0 0.0
        %916 = vmatpush1.xpose.msra.mxu0 0.0
        %917 = vmatprep.subr.mxu0 0.0
        %918 = vmatpush1.xpose.msra.mxu0 0.0
        %919 = vmatprep.subr.mxu0 0.0
        %920 = vmatpush1.xpose.msra.mxu0 0.0
        %921 = vmatprep.subr.mxu0 0.0
        %922 = vmatpush1.xpose.msra.mxu0 0.0
        %923 = vmatprep.subr.mxu0 0.0
        %924 = vmatpush1.xpose.msra.mxu0 0.0
        %925 = vmatprep.subr.mxu0 0.0
        %926 = vmatpush1.xpose.msra.mxu0 0.0
        %927 = vmatprep.subr.mxu0 0.0
        %928 = vmatpush1.xpose.msra.mxu0 0.0
        %929 = vmatprep.subr.mxu0 0.0
        %930 = vmatpush1.xpose.msra.mxu0 0.0
        %931 = vmatprep.subr.mxu0 0.0
        %932 = vmatpush1.xpose.msra.mxu0 0.0
        %933 = vmatprep.subr.mxu0 0.0
        %934 = vmatpush1.xpose.msra.mxu0 0.0
        %935 = vmatprep.subr.mxu0 0.0
        %936 = vmatpush1.xpose.msra.mxu0 0.0
        %937 = vmatprep.mubr.f32.mxu0 0.0
        %938 = vmatmul.mubr.f32.gmra.mrb[0].mxu0 %v868
        %v939 = vpop.f32.mrb[0].mxu0
        %v940 = vadd.f32 0.0, %v939
        %v941 = vpop.f32.mrb[0].mxu0
        %942 = vdwg.mxu0
        %vm943 = vcmask 64512
        %v944 = vsel %vm943, %v940, -inf
        %945 = vmax.xlane.f32.xlu0 %v944
        %v946 = vpop.xlane.xlu0 %945
        %v947 = vsub.f32 %v940, %v946
        %v948 = vmul.f32 %v947, 1.442695
        %v949 = vpow.pop %v948
        %v950 = vsel %vm943, %v949, 0.0
        %951 = vadd.xlane.f32.xlu0 %v950
        %v952 = vpop.xlane.xlu0 %951
        %v953 = vrcp.pop %v952
        %v954 = vmul.f32 %v949, %v953
        %v956 = vsel %vm943, %v954, 0
        %958 = vmatprep.subr.mxu0 0.0
        %959 = vmatpush1.msra.mxu0 %v863
        %960 = vmatprep.subr.mxu0 0.0
        %961 = vmatpush1.msra.mxu0 0.0
        %962 = vmatprep.subr.mxu0 0.0
        %963 = vmatpush1.msra.mxu0 0.0
        %964 = vmatprep.subr.mxu0 0.0
        %965 = vmatpush1.msra.mxu0 0.0
        %966 = vmatprep.subr.mxu0 0.0
        %967 = vmatpush1.msra.mxu0 0.0
        %968 = vmatprep.subr.mxu0 0.0
        %969 = vmatpush1.msra.mxu0 0.0
        %970 = vmatprep.subr.mxu0 0.0
        %971 = vmatpush1.msra.mxu0 0.0
        %972 = vmatprep.subr.mxu0 0.0
        %973 = vmatpush1.msra.mxu0 0.0
        %974 = vmatprep.subr.mxu0 0.0
        %975 = vmatpush1.msra.mxu0 0.0
        %976 = vmatprep.subr.mxu0 0.0
        %977 = vmatpush1.msra.mxu0 0.0
        %978 = vmatprep.subr.mxu0 0.0
        %979 = vmatpush1.msra.mxu0 0.0
        %980 = vmatprep.subr.mxu0 0.0
        %981 = vmatpush1.msra.mxu0 0.0
        %982 = vmatprep.subr.mxu0 0.0
        %983 = vmatpush1.msra.mxu0 0.0
        %984 = vmatprep.subr.mxu0 0.0
        %985 = vmatpush1.msra.mxu0 0.0
        %986 = vmatprep.subr.mxu0 0.0
        %987 = vmatpush1.msra.mxu0 0.0
        %988 = vmatprep.subr.mxu0 0.0
        %989 = vmatpush1.msra.mxu0 0.0
        %990 = vmatprep.subr.mxu0 0.0
        %991 = vmatpush1.msra.mxu0 0.0
        %992 = vmatprep.subr.mxu0 0.0
        %993 = vmatpush1.msra.mxu0 0.0
        %994 = vmatprep.subr.mxu0 0.0
        %995 = vmatpush1.msra.mxu0 0.0
        %996 = vmatprep.subr.mxu0 0.0
        %997 = vmatpush1.msra.mxu0 0.0
        %998 = vmatprep.subr.mxu0 0.0
        %999 = vmatpush1.msra.mxu0 0.0
        %1000 = vmatprep.subr.mxu0 0.0
        %1001 = vmatpush1.msra.mxu0 0.0
        %1002 = vmatprep.subr.mxu0 0.0
        %1003 = vmatpush1.msra.mxu0 0.0
        %1004 = vmatprep.subr.mxu0 0.0
        %1005 = vmatpush1.msra.mxu0 0.0
        %1006 = vmatprep.subr.mxu0 0.0
        %1007 = vmatpush1.msra.mxu0 0.0
        %1008 = vmatprep.subr.mxu0 0.0
        %1009 = vmatpush1.msra.mxu0 0.0
        %1010 = vmatprep.subr.mxu0 0.0
        %1011 = vmatpush1.msra.mxu0 0.0
        %1012 = vmatprep.subr.mxu0 0.0
        %1013 = vmatpush1.msra.mxu0 0.0
        %1014 = vmatprep.subr.mxu0 0.0
        %1015 = vmatpush1.msra.mxu0 0.0
        %1016 = vmatprep.subr.mxu0 0.0
        %1017 = vmatpush1.msra.mxu0 0.0
        %1018 = vmatprep.subr.mxu0 0.0
        %1019 = vmatpush1.msra.mxu0 0.0
        %1020 = vmatprep.subr.mxu0 0.0
        %1021 = vmatpush1.msra.mxu0 0.0
        %1022 = vmatprep.mubr.f32.mxu0 0.0
        %1023 = vmatmul.mubr.f32.gmra.mrb[0].mxu0 %v956
        %v1024 = vpop.f32.mrb[0].mxu0
        %v1025 = vadd.f32 0.0, %v1024
        %v1026 = vpop.f32.mrb[0].mxu0
        %1027 = vdwg.mxu0
        %v1028 = vld [vmem:[%s591] sm:$0xff]
        %v1029 = vld [vmem:[%s591 + $0x8] sm:$0xff]
        %v1030 = vld [vmem:[%s594] sm:$0x1]
        %v1032 = vlaneseq
        %v1033 = vshrl.u32 %v1032, 7
        %v1034 = vsub.s32 0, %v1033
        %v1035 = vrot.slane %v1030, %v1034
        %v1038 = vsel %vm866, %v1025, 0
        %1040 = vmatprep.subr.mxu0 0.0
        %1041 = vmatpush1.msra.mxu0 %v1028
        %1042 = vmatprep.subr.mxu0 0.0
        %1043 = vmatpush1.msra.mxu0 %v1029
        %1044 = vmatprep.subr.mxu0 0.0
        %1045 = vmatpush1.msra.mxu0 0.0
        %1046 = vmatprep.subr.mxu0 0.0
        %1047 = vmatpush1.msra.mxu0 0.0
        %1048 = vmatprep.subr.mxu0 0.0
        %1049 = vmatpush1.msra.mxu0 0.0
        %1050 = vmatprep.subr.mxu0 0.0
        %1051 = vmatpush1.msra.mxu0 0.0
        %1052 = vmatprep.subr.mxu0 0.0
        %1053 = vmatpush1.msra.mxu0 0.0
        %1054 = vmatprep.subr.mxu0 0.0
        %1055 = vmatpush1.msra.mxu0 0.0
        %1056 = vmatprep.subr.mxu0 0.0
        %1057 = vmatpush1.msra.mxu0 0.0
        %1058 = vmatprep.subr.mxu0 0.0
        %1059 = vmatpush1.msra.mxu0 0.0
        %1060 = vmatprep.subr.mxu0 0.0
        %1061 = vmatpush1.msra.mxu0 0.0
        %1062 = vmatprep.subr.mxu0 0.0
        %1063 = vmatpush1.msra.mxu0 0.0
        %1064 = vmatprep.subr.mxu0 0.0
        %1065 = vmatpush1.msra.mxu0 0.0
        %1066 = vmatprep.subr.mxu0 0.0
        %1067 = vmatpush1.msra.mxu0 0.0
        %1068 = vmatprep.subr.mxu0 0.0
        %1069 = vmatpush1.msra.mxu0 0.0
        %1070 = vmatprep.subr.mxu0 0.0
        %1071 = vmatpush1.msra.mxu0 0.0
        %1072 = vmatprep.subr.mxu0 0.0
        %1073 = vmatpush1.msra.mxu0 0.0
        %1074 = vmatprep.subr.mxu0 0.0
        %1075 = vmatpush1.msra.mxu0 0.0
        %1076 = vmatprep.subr.mxu0 0.0
        %1077 = vmatpush1.msra.mxu0 0.0
        %1078 = vmatprep.subr.mxu0 0.0
        %1079 = vmatpush1.msra.mxu0 0.0
        %1080 = vmatprep.subr.mxu0 0.0
        %1081 = vmatpush1.msra.mxu0 0.0
        %1082 = vmatprep.subr.mxu0 0.0
        %1083 = vmatpush1.msra.mxu0 0.0
        %1084 = vmatprep.subr.mxu0 0.0
        %1085 = vmatpush1.msra.mxu0 0.0
        %1086 = vmatprep.subr.mxu0 0.0
        %1087 = vmatpush1.msra.mxu0 0.0
        %1088 = vmatprep.subr.mxu0 0.0
        %1089 = vmatpush1.msra.mxu0 0.0
        %1090 = vmatprep.subr.mxu0 0.0
        %1091 = vmatpush1.msra.mxu0 0.0
        %1092 = vmatprep.subr.mxu0 0.0
        %1093 = vmatpush1.msra.mxu0 0.0
        %1094 = vmatprep.subr.mxu0 0.0
        %1095 = vmatpush1.msra.mxu0 0.0
        %1096 = vmatprep.subr.mxu0 0.0
        %1097 = vmatpush1.msra.mxu0 0.0
        %1098 = vmatprep.subr.mxu0 0.0
        %1099 = vmatpush1.msra.mxu0 0.0
        %1100 = vmatprep.subr.mxu0 0.0
        %1101 = vmatpush1.msra.mxu0 0.0
        %1102 = vmatprep.subr.mxu0 0.0
        %1103 = vmatpush1.msra.mxu0 0.0
        %1104 = vmatprep.mubr.f32.mxu0 0.0
        %1105 = vmatmul.mubr.f32.gmra.mrb[0].mxu0 %v1038
        %v1106 = vpop.f32.mrb[0].mxu0
        %v1107 = vadd.f32 %v1035, %v1106
        %v1108 = vpop.f32.mrb[0].mxu0
        %1109 = vdwg.mxu0
        %v1110 = vadd.f32 %v618, %v1107
        %v1111 = vld [vmem:[%s599] sm:$0xff]
        %v1112 = vld [vmem:[%s599 + $0x8] sm:$0xff]
        %v1113 = vld [vmem:[%s599 + $0x10] sm:$0xff]
        %v1114 = vld [vmem:[%s599 + $0x18] sm:$0xff]
        %v1115 = vld [vmem:[%s602] sm:$0x1]
        %v1117 = vlaneseq
        %v1118 = vshrl.u32 %v1117, 7
        %v1119 = vsub.s32 0, %v1118
        %v1120 = vrot.slane %v1115, %v1119
        %v1123 = vsel %vm630, %v1110, 0
        %1125 = vmatprep.subr.mxu0 0.0
        %1126 = vmatpush1.msra.mxu0 %v1111
        %1127 = vmatprep.subr.mxu0 0.0
        %1128 = vmatpush1.msra.mxu0 %v1112
        %1129 = vmatprep.subr.mxu0 0.0
        %1130 = vmatpush1.msra.mxu0 %v1113
        %1131 = vmatprep.subr.mxu0 0.0
        %1132 = vmatpush1.msra.mxu0 %v1114
        %1133 = vmatprep.subr.mxu0 0.0
        %1134 = vmatpush1.msra.mxu0 0.0
        %1135 = vmatprep.subr.mxu0 0.0
        %1136 = vmatpush1.msra.mxu0 0.0
        %1137 = vmatprep.subr.mxu0 0.0
        %1138 = vmatpush1.msra.mxu0 0.0
        %1139 = vmatprep.subr.mxu0 0.0
        %1140 = vmatpush1.msra.mxu0 0.0
        %1141 = vmatprep.subr.mxu0 0.0
        %1142 = vmatpush1.msra.mxu0 0.0
        %1143 = vmatprep.subr.mxu0 0.0
        %1144 = vmatpush1.msra.mxu0 0.0
        %1145 = vmatprep.subr.mxu0 0.0
        %1146 = vmatpush1.msra.mxu0 0.0
        %1147 = vmatprep.subr.mxu0 0.0
        %1148 = vmatpush1.msra.mxu0 0.0
        %1149 = vmatprep.subr.mxu0 0.0
        %1150 = vmatpush1.msra.mxu0 0.0
        %1151 = vmatprep.subr.mxu0 0.0
        %1152 = vmatpush1.msra.mxu0 0.0
        %1153 = vmatprep.subr.mxu0 0.0
        %1154 = vmatpush1.msra.mxu0 0.0
        %1155 = vmatprep.subr.mxu0 0.0
        %1156 = vmatpush1.msra.mxu0 0.0
        %1157 = vmatprep.subr.mxu0 0.0
        %1158 = vmatpush1.msra.mxu0 0.0
        %1159 = vmatprep.subr.mxu0 0.0
        %1160 = vmatpush1.msra.mxu0 0.0
        %1161 = vmatprep.subr.mxu0 0.0
        %1162 = vmatpush1.msra.mxu0 0.0
        %1163 = vmatprep.subr.mxu0 0.0
        %1164 = vmatpush1.msra.mxu0 0.0
        %1165 = vmatprep.subr.mxu0 0.0
        %1166 = vmatpush1.msra.mxu0 0.0
        %1167 = vmatprep.subr.mxu0 0.0
        %1168 = vmatpush1.msra.mxu0 0.0
        %1169 = vmatprep.subr.mxu0 0.0
        %1170 = vmatpush1.msra.mxu0 0.0
        %1171 = vmatprep.subr.mxu0 0.0
        %1172 = vmatpush1.msra.mxu0 0.0
        %1173 = vmatprep.subr.mxu0 0.0
        %1174 = vmatpush1.msra.mxu0 0.0
        %1175 = vmatprep.subr.mxu0 0.0
        %1176 = vmatpush1.msra.mxu0 0.0
        %1177 = vmatprep.subr.mxu0 0.0
        %1178 = vmatpush1.msra.mxu0 0.0
        %1179 = vmatprep.subr.mxu0 0.0
        %1180 = vmatpush1.msra.mxu0 0.0
        %1181 = vmatprep.subr.mxu0 0.0
        %1182 = vmatpush1.msra.mxu0 0.0
        %1183 = vmatprep.subr.mxu0 0.0
        %1184 = vmatpush1.msra.mxu0 0.0
        %1185 = vmatprep.subr.mxu0 0.0
        %1186 = vmatpush1.msra.mxu0 0.0
        %1187 = vmatprep.subr.mxu0 0.0
        %1188 = vmatpush1.msra.mxu0 0.0
        %1189 = vmatprep.mubr.f32.mxu0 0.0
        %1190 = vmatmul.mubr.f32.gmra.mrb[0].mxu0 %v1123
        %v1191 = vpop.f32.mrb[0].mxu0
        %v1192 = vadd.f32 %v1120, %v1191
        %v1193 = vpop.f32.mrb[0].mxu0
        %1194 = vdwg.mxu0
        %v1195 = vmax.f32 %v1192, 0.0
        %v1196 = vld [vmem:[%s607] sm:$0xff]
        %v1197 = vld [vmem:[%s607 + $0x8] sm:$0xff]
        %v1198 = vld [vmem:[%s607 + $0x10] sm:$0xff]
        %v1199 = vld [vmem:[%s607 + $0x18] sm:$0xff]
        %v1200 = vld [vmem:[%s607 + $0x20] sm:$0xff]
        %v1201 = vld [vmem:[%s607 + $0x28] sm:$0xff]
        %v1202 = vld [vmem:[%s607 + $0x30] sm:$0xff]
        %v1203 = vld [vmem:[%s607 + $0x38] sm:$0xff]
        %v1204 = vld [vmem:[%s610] sm:$0x1]
        %v1206 = vlaneseq
        %v1207 = vshrl.u32 %v1206, 7
        %v1208 = vsub.s32 0, %v1207
        %v1209 = vrot.slane %v1204, %v1208
        %vm1211 = vcmask 523264
        %v1213 = vsel %vm1211, %v1195, 0
        %1215 = vmatprep.subr.mxu0 0.0
        %1216 = vmatpush1.msra.mxu0 %v1196
        %1217 = vmatprep.subr.mxu0 0.0
        %1218 = vmatpush1.msra.mxu0 %v1197
        %1219 = vmatprep.subr.mxu0 0.0
        %1220 = vmatpush1.msra.mxu0 %v1198
        %1221 = vmatprep.subr.mxu0 0.0
        %1222 = vmatpush1.msra.mxu0 %v1199
        %1223 = vmatprep.subr.mxu0 0.0
        %1224 = vmatpush1.msra.mxu0 %v1200
        %1225 = vmatprep.subr.mxu0 0.0
        %1226 = vmatpush1.msra.mxu0 %v1201
        %1227 = vmatprep.subr.mxu0 0.0
        %1228 = vmatpush1.msra.mxu0 %v1202
        %1229 = vmatprep.subr.mxu0 0.0
        %1230 = vmatpush1.msra.mxu0 %v1203
        %1231 = vmatprep.subr.mxu0 0.0
        %1232 = vmatpush1.msra.mxu0 0.0
        %1233 = vmatprep.subr.mxu0 0.0
        %1234 = vmatpush1.msra.mxu0 0.0
        %1235 = vmatprep.subr.mxu0 0.0
        %1236 = vmatpush1.msra.mxu0 0.0
        %1237 = vmatprep.subr.mxu0 0.0
        %1238 = vmatpush1.msra.mxu0 0.0
        %1239 = vmatprep.subr.mxu0 0.0
        %1240 = vmatpush1.msra.mxu0 0.0
        %1241 = vmatprep.subr.mxu0 0.0
        %1242 = vmatpush1.msra.mxu0 0.0
        %1243 = vmatprep.subr.mxu0 0.0
        %1244 = vmatpush1.msra.mxu0 0.0
        %1245 = vmatprep.subr.mxu0 0.0
        %1246 = vmatpush1.msra.mxu0 0.0
        %1247 = vmatprep.subr.mxu0 0.0
        %1248 = vmatpush1.msra.mxu0 0.0
        %1249 = vmatprep.subr.mxu0 0.0
        %1250 = vmatpush1.msra.mxu0 0.0
        %1251 = vmatprep.subr.mxu0 0.0
        %1252 = vmatpush1.msra.mxu0 0.0
        %1253 = vmatprep.subr.mxu0 0.0
        %1254 = vmatpush1.msra.mxu0 0.0
        %1255 = vmatprep.subr.mxu0 0.0
        %1256 = vmatpush1.msra.mxu0 0.0
        %1257 = vmatprep.subr.mxu0 0.0
        %1258 = vmatpush1.msra.mxu0 0.0
        %1259 = vmatprep.subr.mxu0 0.0
        %1260 = vmatpush1.msra.mxu0 0.0
        %1261 = vmatprep.subr.mxu0 0.0
        %1262 = vmatpush1.msra.mxu0 0.0
        %1263 = vmatprep.subr.mxu0 0.0
        %1264 = vmatpush1.msra.mxu0 0.0
        %1265 = vmatprep.subr.mxu0 0.0
        %1266 = vmatpush1.msra.mxu0 0.0
        %1267 = vmatprep.subr.mxu0 0.0
        %1268 = vmatpush1.msra.mxu0 0.0
        %1269 = vmatprep.subr.mxu0 0.0
        %1270 = vmatpush1.msra.mxu0 0.0
        %1271 = vmatprep.subr.mxu0 0.0
        %1272 = vmatpush1.msra.mxu0 0.0
        %1273 = vmatprep.subr.mxu0 0.0
        %1274 = vmatpush1.msra.mxu0 0.0
        %1275 = vmatprep.subr.mxu0 0.0
        %1276 = vmatpush1.msra.mxu0 0.0
        %1277 = vmatprep.subr.mxu0 0.0
        %1278 = vmatpush1.msra.mxu0 0.0
        %1279 = vmatprep.mubr.f32.mxu0 0.0
        %1280 = vmatmul.mubr.f32.gmra.mrb[0].mxu0 %v1213
        %v1281 = vpop.f32.mrb[0].mxu0
        %v1282 = vadd.f32 %v1209, %v1281
        %v1283 = vpop.f32.mrb[0].mxu0
        %1284 = vdwg.mxu0
        %v1285 = vadd.f32 %v1110, %v1282
        %1286 = vst.msk [vmem:[#allocation2] sm:$0xff] %vm630, %v1285
        // Predicated region
        $region77: #{tpu_custom_call.1} parent=71 // pred_check
          %p1287 = pneg %p371
        $region78: #{tpu_custom_call.1} parent=71 // pred_check_branch
          %1289 = sbr.rel (%p1287) target = $region80
        $region79: #{tpu_custom_call.1} parent=71 // pred_region
          %s1291 = ssub.s32 128, 128
          %1292 = vsyncadd [#allocation3], %s1291
          %s1294 = sshll.u32 [#allocation2], 4
          %s1295 = int_to_ptr.vmem [resolvable:$true] %s1294
          %1297 = dma.vmem_to_hbm [thread:$0]  %s1295, 128, %s13, [#allocation3]
        $region80: #{tpu_custom_call.1} parent=71 // pred_fallthru
          _
        // Predicated region
        $region81: #{tpu_custom_call.1} parent=71 // pred_check
          %p1298 = pneg %p371
        $region82: #{tpu_custom_call.1} parent=71 // pred_check_branch
          %1300 = sbr.rel (%p1298) target = $region84
        $region83: #{tpu_custom_call.1} parent=71 // pred_region
          %1301 = dma.done [#allocation3], 128
        $region84: #{tpu_custom_call.1} parent=71 // pred_fallthru
          _
      $region72: #{tpu_custom_call.1} parent=5 // pred_fallthru
        _
      %p1302 = scmp.le.s32.totalorder 2, %s20
      // Predicated region
      $region85: #{tpu_custom_call.1} parent=5 // pred_check
        %p1303 = pneg %p1302
      $region86: #{tpu_custom_call.1} parent=5 // pred_check_branch
        %1305 = sbr.rel (%p1303) target = $region88
      $region87: #{tpu_custom_call.1} parent=5 // pred_region
        %s1306 = ssub.s32 %s20, 2
      $region88: #{tpu_custom_call.1} parent=5 // pred_fallthru
        _
    $region6: #{tpu_custom_call.1} parent=1 // loop_footer
      %s24 = sadd.s32 1, %s20
    $region7: #{tpu_custom_call.1} parent=1 // loop_footer_branch
      %19 = sbr.rel target = $region3
    $region8: #{tpu_custom_call.1} parent=1 // loop_exit
      _
    %1307 = vsyncpa [#allocation3], 1
    %s1308 = scalar_lea.sflag [#allocation3], 1
    %1309 = vsyncpa %s1308, 1

</llo_original>
